<compile_context>
chip_gen: v7x
topology: tpu7x:2x2x1
jax: 0.10.0
libtpu: 0.0.40
codegen_flags: <defaults>
</compile_context>

<pallas_src>
import math
from functools import partial

import jax
import jax.numpy as jnp
from jax.experimental import pallas as pl
from jax.experimental.pallas import tpu as pltpu


def _cdiv(a, b):
    return -(-a // b)


def _round_up(a, b):
    return _cdiv(a, b) * b


def _cat_lane(a, b):
    # concat along the lane axis, tolerating zero-width pieces (d == TL case).
    if a.shape[1] == 0:
        return b
    if b.shape[1] == 0:
        return a
    return jnp.concatenate([a, b], axis=1)


def _vmem_limit_bytes():
    """Scoped-VMEM budget: half of physical VMEM, capped at 64 MiB.

    v5e/v6e: 128 MiB physical -> 64 MiB budget; v7x: 64 MiB -> 32 MiB budget.
    """
    try:
        cap = int(pltpu.get_tpu_info().vmem_capacity_bytes)
    except Exception:
        cap = 128 * 1024 * 1024
    return int(min(max(cap // 2, 16 * 1024 * 1024), 64 * 1024 * 1024))


def _pick_tile_l(*, L, HW, C, B, vmem_limit_bytes, tile_l=None):
    """Pick the length tile TL (multiple of the halo-block width HW)."""
    L_pad = _round_up(L, HW)
    if tile_l is not None:
        # Explicit override (test / debug knob) -- only align it.
        return min(max(HW, _round_up(int(tile_l), HW)), L_pad)

    # Target ~4096 lanes per tile AND at least 4 halo blocks per tile so the
    # +-d halo re-reads stay <= ~25% extra traffic even for big dilations.
    TL = min(max(4 * HW, _round_up(4096, HW)), L_pad)

    # VMEM re-budget (v7x: 64 MiB/TC).  Rough per-step estimate:
    #   double-buffered f32 streams (x, x_low, res, skip tiles + 4 halo blocks)
    #   + tile-wide temps inside the body (bf16 taps/concat, f32 acc/out).
    def est(tl):
        streams = 2 * 4 * C * (4 * tl + 4 * HW)   # 2 buffers, f32 elements
        temps = 44 * C * tl                        # bf16 taps + f32 acc/g/out
        return streams + temps + (1 << 20)         # + weights / bookkeeping

    while TL > HW and est(TL) > vmem_limit_bytes:
        TL -= HW

    # v7x has 2 TensorCores sharing the grid's 'parallel' axes: with B == 1
    # make sure the length axis has at least 2 tiles so both cores get work
    # (only if each resulting tile still spans >= 2 halo blocks).
    if B == 1 and _cdiv(L, TL) == 1 and L > 2 * HW:
        TL2 = _round_up(_cdiv(L, 2), HW)
        if TL2 >= 2 * HW:
            TL = TL2
    return TL


def _residual_block_kernel(x_c_ref, x_lh_ref, x_rh_ref,
                           xl_c_ref, xl_lh_ref, xl_rh_ref,
                           proj_ref, w_big_ref, b_dg_ref, w_out_ref, b_out_ref,
                           res_ref, skip_ref,
                           *, dilation, length):
    d = dilation
    L = length
    TL = x_c_ref.shape[-1]        # tile length (multiple of 128)
    HW = x_lh_ref.shape[-1]       # halo block width (multiple of 128, >= d)
    C = x_c_ref.shape[1]
    t = pl.program_id(1)

    x_c = x_c_ref[0]                                   # (C, TL) f32
    proj = proj_ref[0]                                 # (C, 1)  f32, hoisted Linear

    # d halo columns on either side of the tile, taken from the 128-aligned
    # neighbouring blocks.  At the sequence edges the index_map clamps; the
    # boundary masks below zero those columns (== the conv's zero padding).
    #
    # y = x + proj is computed in f32 (safe on v5e: no bf16 VALU needed), then
    # cast to bf16 for tap assembly -- the MXU operands are bf16 anyway, so
    # numerics are unchanged while select/concat temps and VMEM are halved.
    y_c = (x_c + proj).astype(jnp.bfloat16)                              # (C, TL)
    y_lh = (x_lh_ref[0][:, HW - d:] + proj).astype(jnp.bfloat16)         # (C, d)
    y_rh = (x_rh_ref[0][:, :d] + proj).astype(jnp.bfloat16)              # (C, d)
    xl_c = xl_c_ref[0].astype(jnp.bfloat16)
    xl_lh = xl_lh_ref[0][:, HW - d:].astype(jnp.bfloat16)
    xl_rh = xl_rh_ref[0][:, :d].astype(jnp.bfloat16)

    # Global lane positions of this tile; two cheap (1, TL) masks implement the
    # conv's zero padding and neutralize clamped halos / the ragged last tile.
    pos = t * TL + jax.lax.broadcasted_iota(jnp.int32, (1, TL), 1)
    m_lo = pos >= d            # the -d tap reads a valid position
    m_hi = pos + d < L         # the +d tap reads a valid position

    def tap_windows(center, lh, rh):
        w0 = jnp.where(m_lo, _cat_lane(lh, center[:, :TL - d]), 0.0)   # x[p - d]
        w2 = jnp.where(m_hi, _cat_lane(center[:, d:], rh), 0.0)        # x[p + d]
        return w0, center, w2

    y0, y1, y2 = tap_windows(y_c, y_lh, y_rh)        # dilated_conv input (x + proj)
    l0, l1, l2 = tap_windows(xl_c, xl_lh, xl_rh)     # low_projection input

    # One fused K = 6C matmul (bf16 operands, f32 accumulation) replaces the
    # six per-tap K = C dots.  Row order matches w_big built in the wrapper.
    # NOTE: the contraction is over channels (sublanes) only, so garbage lanes
    # in the ragged last tile / clamped halos never mix into valid lanes, and
    # Pallas masks the partial output writeback -- keep it that way.
    a = jnp.concatenate([y0, y1, y2, l0, l1, l2], axis=0)       # (6C, TL) bf16
    acc = jnp.dot(w_big_ref[...], a, preferred_element_type=jnp.float32)
    acc = acc + b_dg_ref[...]                                   # (2C, TL) f32

    # gate / filter split along channels, gated nonlinearity (kept in f32).
    g = jax.nn.sigmoid(acc[:C]) * jnp.tanh(acc[C:])             # (C, TL)

    # output_projection: 1x1 conv == (2C, C) @ (C, TL) matmul.
    out = jnp.dot(w_out_ref[...], g.astype(w_out_ref.dtype),
                  preferred_element_type=jnp.float32) + b_out_ref[...]
    inv_sqrt2 = 1.0 / math.sqrt(2.0)
    res_ref[0] = ((x_c + out[:C]) * inv_sqrt2).astype(res_ref.dtype)
    skip_ref[0] = out[C:].astype(skip_ref.dtype)


def residual_block_forward(x, x_low, noise_level, params, dilation, *, tile_l=None):
    B, C, L = x.shape
    d = int(dilation)
    assert d >= 1

    # Lane-aligned tiling: halo blocks are HW = round_up(d, 128) wide and the
    # tile length TL is a multiple of HW, so a tile's +-d halo always lives in
    # exactly one neighbouring HW-block of the *unpadded* HBM array.
    HW = _round_up(d, 128)
    NHW = _cdiv(L, HW)                        # HW-blocks covering the sequence
    vmem_limit = _vmem_limit_bytes()
    TL = _pick_tile_l(L=L, HW=HW, C=C, B=B,
                      vmem_limit_bytes=vmem_limit, tile_l=tile_l)
    NT = _cdiv(L, TL)                         # length tiles
    R = TL // HW

    # Hoisted diffusion_projection(noise_level): Linear(P -> C) -> (B, C, 1).
    proj = (noise_level.astype(jnp.float32) @ params["wd"].astype(jnp.float32).T
            + params["bd"].astype(jnp.float32))[:, :, None]

    w_dil, w_low = params["w_dil"], params["w_low"]           # (2C, C, 3)
    # Fused weight, K axis = [dil tap0 | tap1 | tap2 | low tap0 | tap1 | tap2].
    w_big = jnp.concatenate([w_dil[:, :, 0], w_dil[:, :, 1], w_dil[:, :, 2],
                             w_low[:, :, 0], w_low[:, :, 1], w_low[:, :, 2]],
                            axis=1).astype(jnp.bfloat16)      # (2C, 6C)
    b_dg = (params["b_dil"] + params["b_low"]).reshape(2 * C, 1).astype(jnp.float32)
    w_out = params["w_out"][:, :, 0].astype(jnp.bfloat16)     # (2C, C)
    b_out = params["b_out"].reshape(2 * C, 1).astype(jnp.float32)

    kernel = partial(_residual_block_kernel, dilation=d, length=L)

    center = lambda b, t: (b, 0, t)
    left = lambda b, t: (b, 0, jnp.maximum(t * R - 1, 0))
    right = lambda b, t: (b, 0, jnp.minimum((t + 1) * R, NHW - 1))
    full = lambda shape: pl.BlockSpec(shape, lambda b, t: (0,) * len(shape))

    grid_spec = pltpu.PrefetchScalarGridSpec(
        num_scalar_prefetch=0,
        grid=(B, NT),
        in_specs=[
            pl.BlockSpec((1, C, TL), center),        # x       (tile)
            pl.BlockSpec((1, C, HW), left),          # x       (left halo block)
            pl.BlockSpec((1, C, HW), right),         # x       (right halo block)
            pl.BlockSpec((1, C, TL), center),        # x_low   (tile)
            pl.BlockSpec((1, C, HW), left),          # x_low   (left halo block)
            pl.BlockSpec((1, C, HW), right),         # x_low   (right halo block)
            pl.BlockSpec((1, C, 1), lambda b, t: (b, 0, 0)),   # hoisted proj
            full((2 * C, 6 * C)), full((2 * C, 1)),  # fused dilated+low conv w, b
            full((2 * C, C)), full((2 * C, 1)),      # output projection w, b
        ],
        out_specs=[
            pl.BlockSpec((1, C, TL), center),        # residual
            pl.BlockSpec((1, C, TL), center),        # skip
        ],
    )

    # TODO(synk): stream x/x_low/res/skip as bf16 when fused with a bf16
    # upstream/downstream model -- halves HBM traffic of this memory-bound op.
    res, skip = pl.pallas_call(
        kernel,
        out_shape=[jax.ShapeDtypeStruct((B, C, L), x.dtype),
                   jax.ShapeDtypeStruct((B, C, L), x.dtype)],
        grid_spec=grid_spec,
        compiler_params=pltpu.CompilerParams(
            dimension_semantics=("parallel", "parallel"),
            vmem_limit_bytes=vmem_limit),
    )(x, x, x, x_low, x_low, x_low, proj, w_big, b_dg, w_out, b_out)
    return res, skip


def ref_forward(x, x_low, noise_level, params, dilation):
    """Pure-JAX reference matching the PyTorch forward."""
    d = dilation
    proj = noise_level @ params["wd"].T + params["bd"]   # (B, C)
    y = x + proj[:, :, None]

    def conv1d(inp, w, b, dil, pad):
        out = jax.lax.conv_general_dilated(
            inp, w, window_strides=(1,), padding=[(pad, pad)],
            rhs_dilation=(dil,), dimension_numbers=("NCH", "OIH", "NCH"))
        return out + b[None, :, None]

    y = conv1d(y, params["w_dil"], params["b_dil"], d, d)
    y = y + conv1d(x_low, params["w_low"], params["b_low"], d, d)
    gate, filt = jnp.split(y, 2, axis=1)
    y = jax.nn.sigmoid(gate) * jnp.tanh(filt)
    y = conv1d(y, params["w_out"], params["b_out"], 1, 0)
    residual, skip = jnp.split(y, 2, axis=1)
    return (x + residual) / math.sqrt(2.0), skip


if __name__ == "__main__":
    def run_case(key, B, C, L, P, dilation, tile_l):
        ks = jax.random.split(key, 11)
        params = {
            # Linear(P -> C)
            "wd": jax.random.normal(ks[0], (C, P), jnp.float32) / math.sqrt(P),
            "bd": jax.random.normal(ks[1], (C,), jnp.float32) * 0.1,
            # Conv1d(C -> 2C, k=3): kaiming_normal_, std = sqrt(2 / (C*3)).
            "w_dil": jax.random.normal(ks[2], (2 * C, C, 3), jnp.float32) * math.sqrt(2.0 / (C * 3)),
            "b_dil": jax.random.normal(ks[3], (2 * C,), jnp.float32) * 0.1,
            "w_low": jax.random.normal(ks[4], (2 * C, C, 3), jnp.float32) * math.sqrt(2.0 / (C * 3)),
            "b_low": jax.random.normal(ks[5], (2 * C,), jnp.float32) * 0.1,
            # Conv1d(C -> 2C, k=1): kaiming_normal_, std = sqrt(2 / C).
            "w_out": jax.random.normal(ks[6], (2 * C, C, 1), jnp.float32) * math.sqrt(2.0 / C),
            "b_out": jax.random.normal(ks[7], (2 * C,), jnp.float32) * 0.1,
        }
        x = jax.random.normal(ks[8], (B, C, L), jnp.float32)
        x_low = jax.random.normal(ks[9], (B, C, L), jnp.float32)
        noise_level = jax.random.normal(ks[10], (B, P), jnp.float32)

        res, skip = residual_block_forward(x, x_low, noise_level, params,
                                           dilation, tile_l=tile_l)
        jax.block_until_ready((res, skip))

        res_ref, skip_ref = ref_forward(x, x_low, noise_level, params, dilation)
        # bf16 MXU operands -> looser tolerance than pure f32.
        assert jnp.allclose(res, res_ref, atol=5e-2, rtol=5e-2), "residual mismatch"
        assert jnp.allclose(skip, skip_ref, atol=5e-2, rtol=5e-2), "skip mismatch"

    key = jax.random.PRNGKey(0)
    k1, k2, k3 = jax.random.split(key, 3)
    # multi-tile path (explicit small tile): 3 length tiles of 128, halos cross
    # tile boundaries at both edges and in the interior.
    run_case(k1, B=2, C=8, L=384, P=8, dilation=4, tile_l=128)
    # single ragged tile (L=100 < 128), C below the 8-sublane tile, clamped halos.
    run_case(k2, B=1, C=4, L=100, P=8, dilation=2, tile_l=None)
    # large dilation (256-wide halo blocks), auto TL: B==1 split into 2 tiles
    # (512 + ragged 88) so both v7x TensorCores get work; clamped halos.
    run_case(k3, B=1, C=8, L=600, P=8, dilation=150, tile_l=None)

    print("KERNEL_OK")
</pallas_src>

<mosaic_0001>
module attributes {stable_mosaic.version = 11 : i64} {
  func.func @_residual_block_kernel(%arg0: i32, %arg1: i32, %arg2: memref<1x8x128xf32, #tpu.memory_space<vmem>>, %arg3: memref<1x8x128xf32, #tpu.memory_space<vmem>>, %arg4: memref<1x8x128xf32, #tpu.memory_space<vmem>>, %arg5: memref<1x8x128xf32, #tpu.memory_space<vmem>>, %arg6: memref<1x8x128xf32, #tpu.memory_space<vmem>>, %arg7: memref<1x8x128xf32, #tpu.memory_space<vmem>>, %arg8: memref<1x8x1xf32, #tpu.memory_space<vmem>>, %arg9: memref<16x48xbf16, #tpu.memory_space<vmem>>, %arg10: memref<16x1xf32, #tpu.memory_space<vmem>>, %arg11: memref<16x8xbf16, #tpu.memory_space<vmem>>, %arg12: memref<16x1xf32, #tpu.memory_space<vmem>>, %arg13: memref<1x8x128xf32, #tpu.memory_space<vmem>>, %arg14: memref<1x8x128xf32, #tpu.memory_space<vmem>>) attributes {dimension_semantics = [#tpu.dimension_semantics<parallel>, #tpu.dimension_semantics<parallel>], iteration_bounds = array<i64: 2, 3>, scalar_prefetch = 0 : i64, scratch_operands = 0 : i64, tpu.core_type = #tpu.core_type<tc>, window_params = [{transform_indices = @transform_0, window_bounds = array<i64: 1, 8, 128>}, {transform_indices = @transform_1, window_bounds = array<i64: 1, 8, 128>}, {transform_indices = @transform_2, window_bounds = array<i64: 1, 8, 128>}, {transform_indices = @transform_3, window_bounds = array<i64: 1, 8, 128>}, {transform_indices = @transform_4, window_bounds = array<i64: 1, 8, 128>}, {transform_indices = @transform_5, window_bounds = array<i64: 1, 8, 128>}, {transform_indices = @transform_6, window_bounds = array<i64: 1, 8, 1>}, {pipeline_mode = #tpu.pipeline_mode<synchronous>, transform_indices = @transform_7, window_bounds = array<i64: 16, 48>}, {pipeline_mode = #tpu.pipeline_mode<synchronous>, transform_indices = @transform_8, window_bounds = array<i64: 16, 1>}, {pipeline_mode = #tpu.pipeline_mode<synchronous>, transform_indices = @transform_9, window_bounds = array<i64: 16, 8>}, {pipeline_mode = #tpu.pipeline_mode<synchronous>, transform_indices = @transform_10, window_bounds = array<i64: 16, 1>}, {transform_indices = @transform_11, window_bounds = array<i64: 1, 8, 128>}, {transform_indices = @transform_12, window_bounds = array<i64: 1, 8, 128>}]} {
    %c0 = arith.constant 0 : index
    %c0_0 = arith.constant 0 : index
    %c0_1 = arith.constant 0 : index
    %0 = vector.load %arg2[%c0, %c0_0, %c0_1] : memref<1x8x128xf32, #tpu.memory_space<vmem>>, vector<1x8x128xf32>
    %1 = vector.shape_cast %0 : vector<1x8x128xf32> to vector<8x128xf32>
    %c0_2 = arith.constant 0 : index
    %c0_3 = arith.constant 0 : index
    %c0_4 = arith.constant 0 : index
    %2 = vector.load %arg8[%c0_2, %c0_3, %c0_4] : memref<1x8x1xf32, #tpu.memory_space<vmem>>, vector<1x8x1xf32>
    %3 = vector.shape_cast %2 : vector<1x8x1xf32> to vector<8x1xf32>
    %4 = vector.broadcast %3 : vector<8x1xf32> to vector<8x128xf32>
    %5 = arith.addf %1, %4 : vector<8x128xf32>
    %6 = arith.truncf %5 : vector<8x128xf32> to vector<8x128xbf16>
    %c0_5 = arith.constant 0 : index
    %c0_6 = arith.constant 0 : index
    %c0_7 = arith.constant 0 : index
    %7 = vector.load %arg3[%c0_5, %c0_6, %c0_7] : memref<1x8x128xf32, #tpu.memory_space<vmem>>, vector<1x8x128xf32>
    %8 = vector.shape_cast %7 : vector<1x8x128xf32> to vector<8x128xf32>
    %9 = vector.extract_strided_slice %8 {offsets = [0, 124], sizes = [8, 4], strides = [1, 1]} : vector<8x128xf32> to vector<8x4xf32>
    %10 = vector.broadcast %3 : vector<8x1xf32> to vector<8x4xf32>
    %11 = arith.addf %9, %10 : vector<8x4xf32>
    %12 = arith.truncf %11 : vector<8x4xf32> to vector<8x4xbf16>
    %c0_8 = arith.constant 0 : index
    %c0_9 = arith.constant 0 : index
    %c0_10 = arith.constant 0 : index
    %13 = vector.load %arg4[%c0_8, %c0_9, %c0_10] : memref<1x8x128xf32, #tpu.memory_space<vmem>>, vector<1x8x128xf32>
    %14 = vector.shape_cast %13 : vector<1x8x128xf32> to vector<8x128xf32>
    %15 = vector.extract_strided_slice %14 {offsets = [0, 0], sizes = [8, 4], strides = [1, 1]} : vector<8x128xf32> to vector<8x4xf32>
    %16 = vector.broadcast %3 : vector<8x1xf32> to vector<8x4xf32>
    %17 = arith.addf %15, %16 : vector<8x4xf32>
    %18 = arith.truncf %17 : vector<8x4xf32> to vector<8x4xbf16>
    %c0_11 = arith.constant 0 : index
    %c0_12 = arith.constant 0 : index
    %c0_13 = arith.constant 0 : index
    %19 = vector.load %arg5[%c0_11, %c0_12, %c0_13] : memref<1x8x128xf32, #tpu.memory_space<vmem>>, vector<1x8x128xf32>
    %20 = vector.shape_cast %19 : vector<1x8x128xf32> to vector<8x128xf32>
    %21 = arith.truncf %20 : vector<8x128xf32> to vector<8x128xbf16>
    %c0_14 = arith.constant 0 : index
    %c0_15 = arith.constant 0 : index
    %c0_16 = arith.constant 0 : index
    %22 = vector.load %arg6[%c0_14, %c0_15, %c0_16] : memref<1x8x128xf32, #tpu.memory_space<vmem>>, vector<1x8x128xf32>
    %23 = vector.shape_cast %22 : vector<1x8x128xf32> to vector<8x128xf32>
    %24 = vector.extract_strided_slice %23 {offsets = [0, 124], sizes = [8, 4], strides = [1, 1]} : vector<8x128xf32> to vector<8x4xf32>
    %25 = arith.truncf %24 : vector<8x4xf32> to vector<8x4xbf16>
    %c0_17 = arith.constant 0 : index
    %c0_18 = arith.constant 0 : index
    %c0_19 = arith.constant 0 : index
    %26 = vector.load %arg7[%c0_17, %c0_18, %c0_19] : memref<1x8x128xf32, #tpu.memory_space<vmem>>, vector<1x8x128xf32>
    %27 = vector.shape_cast %26 : vector<1x8x128xf32> to vector<8x128xf32>
    %28 = vector.extract_strided_slice %27 {offsets = [0, 0], sizes = [8, 4], strides = [1, 1]} : vector<8x128xf32> to vector<8x4xf32>
    %29 = arith.truncf %28 : vector<8x4xf32> to vector<8x4xbf16>
    %c128_i32 = arith.constant 128 : i32
    %30 = arith.muli %arg1, %c128_i32 : i32
    %31 = tpu.iota {dimensions = array<i32: 1>} : vector<1x128xi32>
    %32 = vector.broadcast %30 : i32 to vector<1x128xi32>
    %33 = arith.addi %32, %31 : vector<1x128xi32>
    %c4_i32 = arith.constant 4 : i32
    %34 = vector.broadcast %c4_i32 : i32 to vector<1x128xi32>
    %35 = arith.cmpi sge, %33, %34 : vector<1x128xi32>
    %c4_i32_20 = arith.constant 4 : i32
    %36 = vector.broadcast %c4_i32_20 : i32 to vector<1x128xi32>
    %37 = arith.addi %33, %36 : vector<1x128xi32>
    %c384_i32 = arith.constant 384 : i32
    %38 = vector.broadcast %c384_i32 : i32 to vector<1x128xi32>
    %39 = arith.cmpi slt, %37, %38 : vector<1x128xi32>
    %40 = vector.extract_strided_slice %6 {offsets = [0, 0], sizes = [8, 124], strides = [1, 1]} : vector<8x128xbf16> to vector<8x124xbf16>
    %41 = tpu.concatenate %12, %40 in 1 : vector<8x4xbf16>, vector<8x124xbf16> -> vector<8x128xbf16>
    %cst = arith.constant 0.000000e+00 : f32
    %42 = arith.truncf %cst : f32 to bf16
    %43 = vector.shape_cast %35 : vector<1x128xi1> to vector<1x128xi1>
    %44 = vector.broadcast %43 : vector<1x128xi1> to vector<8x128xi1>
    %45 = vector.broadcast %42 : bf16 to vector<8x128xbf16>
    %46 = arith.select %44, %41, %45 : vector<8x128xi1>, vector<8x128xbf16>
    %47 = vector.extract_strided_slice %6 {offsets = [0, 4], sizes = [8, 124], strides = [1, 1]} : vector<8x128xbf16> to vector<8x124xbf16>
    %48 = tpu.concatenate %47, %18 in 1 : vector<8x124xbf16>, vector<8x4xbf16> -> vector<8x128xbf16>
    %cst_21 = arith.constant 0.000000e+00 : f32
    %49 = arith.truncf %cst_21 : f32 to bf16
    %50 = vector.shape_cast %39 : vector<1x128xi1> to vector<1x128xi1>
    %51 = vector.broadcast %50 : vector<1x128xi1> to vector<8x128xi1>
    %52 = vector.broadcast %49 : bf16 to vector<8x128xbf16>
    %53 = arith.select %51, %48, %52 : vector<8x128xi1>, vector<8x128xbf16>
    %54 = vector.extract_strided_slice %21 {offsets = [0, 0], sizes = [8, 124], strides = [1, 1]} : vector<8x128xbf16> to vector<8x124xbf16>
    %55 = tpu.concatenate %25, %54 in 1 : vector<8x4xbf16>, vector<8x124xbf16> -> vector<8x128xbf16>
    %cst_22 = arith.constant 0.000000e+00 : f32
    %56 = arith.truncf %cst_22 : f32 to bf16
    %57 = vector.shape_cast %35 : vector<1x128xi1> to vector<1x128xi1>
    %58 = vector.broadcast %57 : vector<1x128xi1> to vector<8x128xi1>
    %59 = vector.broadcast %56 : bf16 to vector<8x128xbf16>
    %60 = arith.select %58, %55, %59 : vector<8x128xi1>, vector<8x128xbf16>
    %61 = vector.extract_strided_slice %21 {offsets = [0, 4], sizes = [8, 124], strides = [1, 1]} : vector<8x128xbf16> to vector<8x124xbf16>
    %62 = tpu.concatenate %61, %29 in 1 : vector<8x124xbf16>, vector<8x4xbf16> -> vector<8x128xbf16>
    %cst_23 = arith.constant 0.000000e+00 : f32
    %63 = arith.truncf %cst_23 : f32 to bf16
    %64 = vector.shape_cast %39 : vector<1x128xi1> to vector<1x128xi1>
    %65 = vector.broadcast %64 : vector<1x128xi1> to vector<8x128xi1>
    %66 = vector.broadcast %63 : bf16 to vector<8x128xbf16>
    %67 = arith.select %65, %62, %66 : vector<8x128xi1>, vector<8x128xbf16>
    %68 = tpu.concatenate %46, %6, %53, %60, %21, %67 in 0 : vector<8x128xbf16>, vector<8x128xbf16>, vector<8x128xbf16>, vector<8x128xbf16>, vector<8x128xbf16>, vector<8x128xbf16> -> vector<48x128xbf16>
    %c0_24 = arith.constant 0 : index
    %c0_25 = arith.constant 0 : index
    %69 = vector.load %arg9[%c0_24, %c0_25] : memref<16x48xbf16, #tpu.memory_space<vmem>>, vector<16x48xbf16>
    %cst_26 = arith.constant dense<0.000000e+00> : vector<16x128xf32>
    %70 = tpu.matmul %69, %68, %cst_26 {dimension_numbers = #tpu.dot_dimension_numbers<[1], [0], [0], [1], [0, 0, 1, 1], [], []>} : vector<16x48xbf16>, vector<48x128xbf16>, vector<16x128xf32> -> vector<16x128xf32>
    %c0_27 = arith.constant 0 : index
    %c0_28 = arith.constant 0 : index
    %71 = vector.load %arg10[%c0_27, %c0_28] : memref<16x1xf32, #tpu.memory_space<vmem>>, vector<16x1xf32>
    %72 = vector.broadcast %71 : vector<16x1xf32> to vector<16x128xf32>
    %73 = arith.addf %70, %72 : vector<16x128xf32>
    %74 = vector.extract_strided_slice %73 {offsets = [0, 0], sizes = [8, 128], strides = [1, 1]} : vector<16x128xf32> to vector<8x128xf32>
    %75 = arith.negf %74 : vector<8x128xf32>
    %76 = math.exp %75 : vector<8x128xf32>
    %cst_29 = arith.constant 1.000000e+00 : f32
    %77 = vector.broadcast %cst_29 : f32 to vector<8x128xf32>
    %78 = arith.addf %77, %76 : vector<8x128xf32>
    %79 = arith.divf %77, %78 : vector<8x128xf32>
    %80 = vector.extract_strided_slice %73 {offsets = [8, 0], sizes = [8, 128], strides = [1, 1]} : vector<16x128xf32> to vector<8x128xf32>
    %81 = math.tanh %80 : vector<8x128xf32>
    %82 = arith.mulf %79, %81 : vector<8x128xf32>
    %c0_30 = arith.constant 0 : index
    %c0_31 = arith.constant 0 : index
    %83 = vector.load %arg11[%c0_30, %c0_31] : memref<16x8xbf16, #tpu.memory_space<vmem>>, vector<16x8xbf16>
    %84 = arith.truncf %82 : vector<8x128xf32> to vector<8x128xbf16>
    %cst_32 = arith.constant dense<0.000000e+00> : vector<16x128xf32>
    %85 = tpu.matmul %83, %84, %cst_32 {dimension_numbers = #tpu.dot_dimension_numbers<[1], [0], [0], [1], [0, 0, 1, 1], [], []>} : vector<16x8xbf16>, vector<8x128xbf16>, vector<16x128xf32> -> vector<16x128xf32>
    %c0_33 = arith.constant 0 : index
    %c0_34 = arith.constant 0 : index
    %86 = vector.load %arg12[%c0_33, %c0_34] : memref<16x1xf32, #tpu.memory_space<vmem>>, vector<16x1xf32>
    %87 = vector.broadcast %86 : vector<16x1xf32> to vector<16x128xf32>
    %88 = arith.addf %85, %87 : vector<16x128xf32>
    %89 = vector.extract_strided_slice %88 {offsets = [0, 0], sizes = [8, 128], strides = [1, 1]} : vector<16x128xf32> to vector<8x128xf32>
    %90 = arith.addf %1, %89 : vector<8x128xf32>
    %cst_35 = arith.constant 0.707106769 : f32
    %91 = vector.broadcast %cst_35 : f32 to vector<8x128xf32>
    %92 = arith.mulf %90, %91 : vector<8x128xf32>
    %c0_36 = arith.constant 0 : index
    %c0_37 = arith.constant 0 : index
    %c0_38 = arith.constant 0 : index
    %93 = vector.load %arg13[%c0_36, %c0_37, %c0_38] : memref<1x8x128xf32, #tpu.memory_space<vmem>>, vector<1x8x128xf32>
    %94 = vector.shape_cast %93 : vector<1x8x128xf32> to vector<8x128xf32>
    %95 = vector.shape_cast %92 : vector<8x128xf32> to vector<1x8x128xf32>
    tpu.vector_store %arg13[%c0_36, %c0_37, %c0_38], %95 {strides = array<i32>} : memref<1x8x128xf32, #tpu.memory_space<vmem>>, vector<1x8x128xf32>,
    %96 = vector.extract_strided_slice %88 {offsets = [8, 0], sizes = [8, 128], strides = [1, 1]} : vector<16x128xf32> to vector<8x128xf32>
    %c0_39 = arith.constant 0 : index
    %c0_40 = arith.constant 0 : index
    %c0_41 = arith.constant 0 : index
    %97 = vector.load %arg14[%c0_39, %c0_40, %c0_41] : memref<1x8x128xf32, #tpu.memory_space<vmem>>, vector<1x8x128xf32>
    %98 = vector.shape_cast %97 : vector<1x8x128xf32> to vector<8x128xf32>
    %99 = vector.shape_cast %96 : vector<8x128xf32> to vector<1x8x128xf32>
    tpu.vector_store %arg14[%c0_39, %c0_40, %c0_41], %99 {strides = array<i32>} : memref<1x8x128xf32, #tpu.memory_space<vmem>>, vector<1x8x128xf32>,
    return
  }
  func.func @transform_0(%arg0: i32, %arg1: i32) -> (i32, i32, i32) {
    %c0_i32 = arith.constant 0 : i32
    %c0_i32_0 = arith.constant 0 : i32
    return %arg0, %c0_i32, %arg1 : i32, i32, i32
  }
  func.func @transform_1(%arg0: i32, %arg1: i32) -> (i32, i32, i32) {
    %c1_i32 = arith.constant 1 : i32
    %0 = arith.muli %arg1, %c1_i32 : i32
    %c1_i32_0 = arith.constant 1 : i32
    %1 = arith.subi %0, %c1_i32_0 : i32
    %c0_i32 = arith.constant 0 : i32
    %2 = arith.maxsi %1, %c0_i32 : i32
    %c0_i32_1 = arith.constant 0 : i32
    %c0_i32_2 = arith.constant 0 : i32
    return %arg0, %c0_i32_1, %2 : i32, i32, i32
  }
  func.func @transform_2(%arg0: i32, %arg1: i32) -> (i32, i32, i32) {
    %c1_i32 = arith.constant 1 : i32
    %0 = arith.addi %arg1, %c1_i32 : i32
    %c1_i32_0 = arith.constant 1 : i32
    %1 = arith.muli %0, %c1_i32_0 : i32
    %c2_i32 = arith.constant 2 : i32
    %2 = arith.minsi %1, %c2_i32 : i32
    %c0_i32 = arith.constant 0 : i32
    %c0_i32_1 = arith.constant 0 : i32
    return %arg0, %c0_i32, %2 : i32, i32, i32
  }
  func.func @transform_3(%arg0: i32, %arg1: i32) -> (i32, i32, i32) {
    %c0_i32 = arith.constant 0 : i32
    %c0_i32_0 = arith.constant 0 : i32
    return %arg0, %c0_i32, %arg1 : i32, i32, i32
  }
  func.func @transform_4(%arg0: i32, %arg1: i32) -> (i32, i32, i32) {
    %c1_i32 = arith.constant 1 : i32
    %0 = arith.muli %arg1, %c1_i32 : i32
    %c1_i32_0 = arith.constant 1 : i32
    %1 = arith.subi %0, %c1_i32_0 : i32
    %c0_i32 = arith.constant 0 : i32
    %2 = arith.maxsi %1, %c0_i32 : i32
    %c0_i32_1 = arith.constant 0 : i32
    %c0_i32_2 = arith.constant 0 : i32
    return %arg0, %c0_i32_1, %2 : i32, i32, i32
  }
  func.func @transform_5(%arg0: i32, %arg1: i32) -> (i32, i32, i32) {
    %c1_i32 = arith.constant 1 : i32
    %0 = arith.addi %arg1, %c1_i32 : i32
    %c1_i32_0 = arith.constant 1 : i32
    %1 = arith.muli %0, %c1_i32_0 : i32
    %c2_i32 = arith.constant 2 : i32
    %2 = arith.minsi %1, %c2_i32 : i32
    %c0_i32 = arith.constant 0 : i32
    %c0_i32_1 = arith.constant 0 : i32
    return %arg0, %c0_i32, %2 : i32, i32, i32
  }
  func.func @transform_6(%arg0: i32, %arg1: i32) -> (i32, i32, i32) {
    %c0_i32 = arith.constant 0 : i32
    %c0_i32_0 = arith.constant 0 : i32
    %c0_i32_1 = arith.constant 0 : i32
    return %arg0, %c0_i32, %c0_i32_0 : i32, i32, i32
  }
  func.func @transform_7(%arg0: i32, %arg1: i32) -> (i32, i32) {
    %c0_i32 = arith.constant 0 : i32
    %c0_i32_0 = arith.constant 0 : i32
    %c0_i32_1 = arith.constant 0 : i32
    return %c0_i32, %c0_i32_0 : i32, i32
  }
  func.func @transform_8(%arg0: i32, %arg1: i32) -> (i32, i32) {
    %c0_i32 = arith.constant 0 : i32
    %c0_i32_0 = arith.constant 0 : i32
    %c0_i32_1 = arith.constant 0 : i32
    return %c0_i32, %c0_i32_0 : i32, i32
  }
  func.func @transform_9(%arg0: i32, %arg1: i32) -> (i32, i32) {
    %c0_i32 = arith.constant 0 : i32
    %c0_i32_0 = arith.constant 0 : i32
    %c0_i32_1 = arith.constant 0 : i32
    return %c0_i32, %c0_i32_0 : i32, i32
  }
  func.func @transform_10(%arg0: i32, %arg1: i32) -> (i32, i32) {
    %c0_i32 = arith.constant 0 : i32
    %c0_i32_0 = arith.constant 0 : i32
    %c0_i32_1 = arith.constant 0 : i32
    return %c0_i32, %c0_i32_0 : i32, i32
  }
  func.func @transform_11(%arg0: i32, %arg1: i32) -> (i32, i32, i32) {
    %c0_i32 = arith.constant 0 : i32
    %c0_i32_0 = arith.constant 0 : i32
    return %arg0, %c0_i32, %arg1 : i32, i32, i32
  }
  func.func @transform_12(%arg0: i32, %arg1: i32) -> (i32, i32, i32) {
    %c0_i32 = arith.constant 0 : i32
    %c0_i32_0 = arith.constant 0 : i32
    return %arg0, %c0_i32, %arg1 : i32, i32, i32
  }
}

</mosaic_0001>

<llo_original>
// kernel: tpu_custom_call.1
$region0: #{tpu_custom_call.1}
  #allocation0 [shape = 'u32[]', space=smem, size = 0x4, offset = 0x4, fixed_abs, tag = 'smem constant byte address 0x4 - core index']
  #allocation1 [shape = 'u32[144,128]{1,0:T(1,128)}', space=vmem, size = 0x12000, scoped, tag = 'internal scratch']
  %s0 = inlined_call_operand.hbm [shape: f32[2,8,384], index: 0, kind: input, shape index: {}]
  %s1 = inlined_call_operand.hbm [shape: f32[2,8,384], index: 1, kind: input, shape index: {}]
  %s2 = inlined_call_operand.hbm [shape: f32[2,8,384], index: 2, kind: input, shape index: {}]
  %s3 = inlined_call_operand.hbm [shape: f32[2,8,384], index: 3, kind: input, shape index: {}]
  %s4 = inlined_call_operand.hbm [shape: f32[2,8,384], index: 4, kind: input, shape index: {}]
  %s5 = inlined_call_operand.hbm [shape: f32[2,8,384], index: 5, kind: input, shape index: {}]
  %s6 = inlined_call_operand.hbm [shape: f32[2,8,1], index: 6, kind: input, shape index: {}]
  %s7 = inlined_call_operand.hbm [shape: bf16[16,48], index: 7, kind: input, shape index: {}]
  %s8 = inlined_call_operand.hbm [shape: f32[16,1], index: 8, kind: input, shape index: {}]
  %s9 = inlined_call_operand.hbm [shape: bf16[16,8], index: 9, kind: input, shape index: {}]
  %s10 = inlined_call_operand.hbm [shape: f32[16,1], index: 10, kind: input, shape index: {}]
  %s11 = inlined_call_operand.hbm [shape: f32[2,8,384], index: 11, kind: output, shape index: {0}]
  %s12 = inlined_call_operand.hbm [shape: f32[2,8,384], index: 12, kind: output, shape index: {1}]
  %13 = xla_tuple %s11, %s12
  %s14 = sld [smem:[#allocation0]]
  $region129: #{tpu_custom_call.1} parent=0
    _
  %s16 = ssub.s32 1, %s14
  %s17 = scalar_select 0, %s16, %s14
  $region1: #{tpu_custom_call.1} parent=0
    #allocation2 [shape = 'u8[8192]{0}', space=vmem, size = 0x2000, scoped, tag = 'input window, operand 0']
    #allocation3 [shape = 's32[2]{0}', space=sflag, size = 0x8, scoped, tag = 'scoped memory for tpu_custom_call.1']
    #allocation4 [shape = 's32[2]{0}', space=sflag, size = 0x8, scoped, tag = 'scoped memory for tpu_custom_call.1']
    #allocation5 [shape = 'u8[8192]{0}', space=vmem, size = 0x2000, scoped, tag = 'input window, operand 1']
    #allocation6 [shape = 's32[2]{0}', space=sflag, size = 0x8, scoped, tag = 'scoped memory for tpu_custom_call.1']
    #allocation7 [shape = 'u8[8192]{0}', space=vmem, size = 0x2000, scoped, tag = 'input window, operand 2']
    #allocation8 [shape = 'u8[8192]{0}', space=vmem, size = 0x2000, scoped, tag = 'input window, operand 3']
    #allocation9 [shape = 's32[2]{0}', space=sflag, size = 0x8, scoped, tag = 'scoped memory for tpu_custom_call.1']
    #allocation10 [shape = 'u8[8192]{0}', space=vmem, size = 0x2000, scoped, tag = 'input window, operand 4']
    #allocation11 [shape = 'u8[8192]{0}', space=vmem, size = 0x2000, scoped, tag = 'input window, operand 5']
    #allocation12 [shape = 's32[2]{0}', space=sflag, size = 0x8, scoped, tag = 'scoped memory for tpu_custom_call.1']
    #allocation13 [shape = 'u8[8192]{0}', space=vmem, size = 0x2000, scoped, tag = 'input window, operand 6']
    #allocation14 [shape = 'u8[4096]{0}', space=vmem, size = 0x1000, scoped, tag = 'input window, operand 7, single buffered']
    #allocation15 [shape = 's32[1]{0}', space=sflag, size = 0x4, scoped, tag = 'scoped memory for tpu_custom_call.1']
    #allocation16 [shape = 'u8[8192]{0}', space=vmem, size = 0x2000, scoped, tag = 'input window, operand 8, single buffered']
    #allocation17 [shape = 'u8[4096]{0}', space=vmem, size = 0x1000, scoped, tag = 'input window, operand 9, single buffered']
    #allocation18 [shape = 's32[1]{0}', space=sflag, size = 0x4, scoped, tag = 'scoped memory for tpu_custom_call.1']
    #allocation19 [shape = 'u8[8192]{0}', space=vmem, size = 0x2000, scoped, tag = 'input window, operand 10, single buffered']
    #allocation20 [shape = 'u8[8192]{0}', space=vmem, size = 0x2000, scoped, tag = 'output window, operand 0']
    #allocation21 [shape = 'u8[8192]{0}', space=vmem, size = 0x2000, scoped, tag = 'output window, operand 1']
    #allocation22 [shape = 's32[2]{0}', space=sflag, size = 0x8, scoped, tag = 'scoped memory for tpu_custom_call.1']
    %18 = vsyncpa [#allocation3], 0
    %s19 = scalar_lea.sflag [#allocation3], 1
    %20 = vsyncpa %s19, 0
    %21 = vsyncpa [#allocation6], 0
    %s22 = scalar_lea.sflag [#allocation6], 1
    %23 = vsyncpa %s22, 0
    %24 = vsyncpa [#allocation9], 0
    %s25 = scalar_lea.sflag [#allocation9], 1
    %26 = vsyncpa %s25, 0
    %27 = vsyncpa [#allocation12], 0
    %s28 = scalar_lea.sflag [#allocation12], 1
    %29 = vsyncpa %s28, 0
    %30 = vsyncpa [#allocation15], 0
    %31 = vsyncpa [#allocation18], 0
    %32 = vsyncpa [#allocation4], 0
    %s33 = scalar_lea.sflag [#allocation4], 1
    %34 = vsyncpa %s33, 0
    %35 = vsyncpa [#allocation22], 0
    %s36 = scalar_lea.sflag [#allocation22], 1
    %37 = vsyncpa %s36, 0
    loop: start=0, step=1, limit=8
    $region2: #{tpu_custom_call.1} parent=1 // loop_pre_header
      _
    $region3: #{tpu_custom_call.1} parent=1 // loop_header
      %s39 = sphi 0, %s43
      %p40 = scmp.ge.s32.totalorder %s39, 8
      %s46 = sphi 0, %s58
      %s47 = sphi 0, %s54
      %s48 = sphi 0, %s46
      %s49 = sphi 0, %s47
      %s50 = sphi 0, %s48
      %s51 = sphi 0, %s49
      %s63 = sphi 0, %s65
      %s66 = sphi 0, %s63
      %s67 = sphi 0, %s66
      %s83 = sphi 0, %s67
      %s97 = sphi 0, %s99
      %s100 = sphi 0, %s97
      %s101 = sphi 0, %s100
      %s117 = sphi 0, %s101
      %s131 = sphi 0, %s133
      %s134 = sphi 0, %s131
      %s135 = sphi 0, %s134
      %s151 = sphi 0, %s135
      %s159 = sphi 0, %s161
      %s162 = sphi 0, %s159
      %s163 = sphi 0, %s162
      %s179 = sphi 0, %s163
      %s193 = sphi 0, %s195
      %s196 = sphi 0, %s193
      %s197 = sphi 0, %s196
      %s213 = sphi 0, %s197
      %s227 = sphi 0, %s229
      %s230 = sphi 0, %s227
      %s231 = sphi 0, %s230
      %s247 = sphi 0, %s231
      %s253 = sphi 0, %s255
      %s256 = sphi 0, %s253
      %s257 = sphi 0, %s256
      %s273 = sphi 0, %s257
      %s277 = sphi 0, %s277
      %s279 = sphi 0, %s277
      %s280 = sphi 0, %s279
      %s294 = sphi 0, %s280
      %s298 = sphi 0, %s298
      %s300 = sphi 0, %s298
      %s301 = sphi 0, %s300
      %s315 = sphi 0, %s301
      %s319 = sphi 0, %s319
      %s321 = sphi 0, %s319
      %s322 = sphi 0, %s321
      %s336 = sphi 0, %s322
      %s340 = sphi 0, %s340
      %s342 = sphi 0, %s340
      %s343 = sphi 0, %s342
      %s357 = sphi 0, %s343
      %s365 = sphi 0, %s367
      %s368 = sphi 0, %s365
      %s369 = sphi 0, %s368
      %s385 = sphi 0, %s369
      %s393 = sphi 0, %s395
      %s396 = sphi 0, %s393
      %s397 = sphi 0, %s396
      %s413 = sphi 0, %s397
    $region4: #{tpu_custom_call.1} parent=1 // loop_header_branch
      %42 = sbr.rel (%p40) target = $region8
    $region5: #{tpu_custom_call.1} parent=1 // loop_body
      %s44 = ssub.s32 %s39, 1
      %s45 = ssub.s32 %s39, 2
      %s52 = sadd.s32 1, %s47
      %p53 = scmp.ge.s32.totalorder %s52, 3
      %s54 = scalar_select %p53, 0, %s52
      %s55 = sadd.s32 1, %s46
      %s56 = scalar_select %p53, %s55, %s46
      %p57 = scmp.ge.s32.totalorder %s56, 2
      %s58 = scalar_select %p57, 0, %s56
      %s59 = ssub.s32 %s46, %s58
      %s60 = ssub.s32 %s47, %s54
      %s61 = sor.u32 %s59, %s60
      %p62 = scmp.eq.s32.totalorder %s61, 0
      %s64 = sadd.s32 %s63, 1
      %s65 = scalar_select %p62, %s63, %s64
      %p68 = pneg %p62
      %p69 = scmp.eq.s32.totalorder %s39, 5
      %p70 = por %p68, %p69
      %p71 = scmp.ne.s32.totalorder %s63, %s66
      %p72 = scmp.eq.s32.totalorder %s39, 0
      %p73 = por %p71, %p72
      %p74 = scmp.ne.s32.totalorder %s63, %s66
      %p75 = scmp.eq.s32.totalorder %s44, 5
      %p76 = por %p74, %p75
      %p77 = scmp.ne.s32.totalorder %s66, %s67
      %p78 = scmp.eq.s32.totalorder %s44, 0
      %p79 = por %p77, %p78
      %p80 = scmp.ne.s32.totalorder %s66, %s67
      %p81 = scmp.eq.s32.totalorder %s45, 5
      %p82 = por %p80, %p81
      %p84 = scmp.ne.s32.totalorder %s67, %s83
      %p85 = scmp.eq.s32.totalorder %s45, 0
      %p86 = por %p84, %p85
      %s87 = ssub.s32 %s47, 1
      %p88 = scmp.gt.s32.totalorder %s87, 0
      %s89 = scalar_select %p88, %s87, 0
      %s90 = ssub.s32 %s54, 1
      %p91 = scmp.gt.s32.totalorder %s90, 0
      %s92 = scalar_select %p91, %s90, 0
      %s93 = ssub.s32 %s46, %s58
      %s94 = ssub.s32 %s89, %s92
      %s95 = sor.u32 %s93, %s94
      %p96 = scmp.eq.s32.totalorder %s95, 0
      %s98 = sadd.s32 %s97, 1
      %s99 = scalar_select %p96, %s97, %s98
      %p102 = pneg %p96
      %p103 = scmp.eq.s32.totalorder %s39, 5
      %p104 = por %p102, %p103
      %p105 = scmp.ne.s32.totalorder %s97, %s100
      %p106 = scmp.eq.s32.totalorder %s39, 0
      %p107 = por %p105, %p106
      %p108 = scmp.ne.s32.totalorder %s97, %s100
      %p109 = scmp.eq.s32.totalorder %s44, 5
      %p110 = por %p108, %p109
      %p111 = scmp.ne.s32.totalorder %s100, %s101
      %p112 = scmp.eq.s32.totalorder %s44, 0
      %p113 = por %p111, %p112
      %p114 = scmp.ne.s32.totalorder %s100, %s101
      %p115 = scmp.eq.s32.totalorder %s45, 5
      %p116 = por %p114, %p115
      %p118 = scmp.ne.s32.totalorder %s101, %s117
      %p119 = scmp.eq.s32.totalorder %s45, 0
      %p120 = por %p118, %p119
      %s121 = sadd.s32 %s47, 1
      %p122 = scmp.lt.s32.totalorder %s121, 2
      %s123 = scalar_select %p122, %s121, 2
      %s124 = sadd.s32 %s54, 1
      %p125 = scmp.lt.s32.totalorder %s124, 2
      %s126 = scalar_select %p125, %s124, 2
      %s127 = ssub.s32 %s46, %s58
      %s128 = ssub.s32 %s123, %s126
      %s129 = sor.u32 %s127, %s128
      %p130 = scmp.eq.s32.totalorder %s129, 0
      %s132 = sadd.s32 %s131, 1
      %s133 = scalar_select %p130, %s131, %s132
      %p136 = pneg %p130
      %p137 = scmp.eq.s32.totalorder %s39, 5
      %p138 = por %p136, %p137
      %p139 = scmp.ne.s32.totalorder %s131, %s134
      %p140 = scmp.eq.s32.totalorder %s39, 0
      %p141 = por %p139, %p140
      %p142 = scmp.ne.s32.totalorder %s131, %s134
      %p143 = scmp.eq.s32.totalorder %s44, 5
      %p144 = por %p142, %p143
      %p145 = scmp.ne.s32.totalorder %s134, %s135
      %p146 = scmp.eq.s32.totalorder %s44, 0
      %p147 = por %p145, %p146
      %p148 = scmp.ne.s32.totalorder %s134, %s135
      %p149 = scmp.eq.s32.totalorder %s45, 5
      %p150 = por %p148, %p149
      %p152 = scmp.ne.s32.totalorder %s135, %s151
      %p153 = scmp.eq.s32.totalorder %s45, 0
      %p154 = por %p152, %p153
      %s155 = ssub.s32 %s46, %s58
      %s156 = ssub.s32 %s47, %s54
      %s157 = sor.u32 %s155, %s156
      %p158 = scmp.eq.s32.totalorder %s157, 0
      %s160 = sadd.s32 %s159, 1
      %s161 = scalar_select %p158, %s159, %s160
      %p164 = pneg %p158
      %p165 = scmp.eq.s32.totalorder %s39, 5
      %p166 = por %p164, %p165
      %p167 = scmp.ne.s32.totalorder %s159, %s162
      %p168 = scmp.eq.s32.totalorder %s39, 0
      %p169 = por %p167, %p168
      %p170 = scmp.ne.s32.totalorder %s159, %s162
      %p171 = scmp.eq.s32.totalorder %s44, 5
      %p172 = por %p170, %p171
      %p173 = scmp.ne.s32.totalorder %s162, %s163
      %p174 = scmp.eq.s32.totalorder %s44, 0
      %p175 = por %p173, %p174
      %p176 = scmp.ne.s32.totalorder %s162, %s163
      %p177 = scmp.eq.s32.totalorder %s45, 5
      %p178 = por %p176, %p177
      %p180 = scmp.ne.s32.totalorder %s163, %s179
      %p181 = scmp.eq.s32.totalorder %s45, 0
      %p182 = por %p180, %p181
      %s183 = ssub.s32 %s47, 1
      %p184 = scmp.gt.s32.totalorder %s183, 0
      %s185 = scalar_select %p184, %s183, 0
      %s186 = ssub.s32 %s54, 1
      %p187 = scmp.gt.s32.totalorder %s186, 0
      %s188 = scalar_select %p187, %s186, 0
      %s189 = ssub.s32 %s46, %s58
      %s190 = ssub.s32 %s185, %s188
      %s191 = sor.u32 %s189, %s190
      %p192 = scmp.eq.s32.totalorder %s191, 0
      %s194 = sadd.s32 %s193, 1
      %s195 = scalar_select %p192, %s193, %s194
      %p198 = pneg %p192
      %p199 = scmp.eq.s32.totalorder %s39, 5
      %p200 = por %p198, %p199
      %p201 = scmp.ne.s32.totalorder %s193, %s196
      %p202 = scmp.eq.s32.totalorder %s39, 0
      %p203 = por %p201, %p202
      %p204 = scmp.ne.s32.totalorder %s193, %s196
      %p205 = scmp.eq.s32.totalorder %s44, 5
      %p206 = por %p204, %p205
      %p207 = scmp.ne.s32.totalorder %s196, %s197
      %p208 = scmp.eq.s32.totalorder %s44, 0
      %p209 = por %p207, %p208
      %p210 = scmp.ne.s32.totalorder %s196, %s197
      %p211 = scmp.eq.s32.totalorder %s45, 5
      %p212 = por %p210, %p211
      %p214 = scmp.ne.s32.totalorder %s197, %s213
      %p215 = scmp.eq.s32.totalorder %s45, 0
      %p216 = por %p214, %p215
      %s217 = sadd.s32 %s47, 1
      %p218 = scmp.lt.s32.totalorder %s217, 2
      %s219 = scalar_select %p218, %s217, 2
      %s220 = sadd.s32 %s54, 1
      %p221 = scmp.lt.s32.totalorder %s220, 2
      %s222 = scalar_select %p221, %s220, 2
      %s223 = ssub.s32 %s46, %s58
      %s224 = ssub.s32 %s219, %s222
      %s225 = sor.u32 %s223, %s224
      %p226 = scmp.eq.s32.totalorder %s225, 0
      %s228 = sadd.s32 %s227, 1
      %s229 = scalar_select %p226, %s227, %s228
      %p232 = pneg %p226
      %p233 = scmp.eq.s32.totalorder %s39, 5
      %p234 = por %p232, %p233
      %p235 = scmp.ne.s32.totalorder %s227, %s230
      %p236 = scmp.eq.s32.totalorder %s39, 0
      %p237 = por %p235, %p236
      %p238 = scmp.ne.s32.totalorder %s227, %s230
      %p239 = scmp.eq.s32.totalorder %s44, 5
      %p240 = por %p238, %p239
      %p241 = scmp.ne.s32.totalorder %s230, %s231
      %p242 = scmp.eq.s32.totalorder %s44, 0
      %p243 = por %p241, %p242
      %p244 = scmp.ne.s32.totalorder %s230, %s231
      %p245 = scmp.eq.s32.totalorder %s45, 5
      %p246 = por %p244, %p245
      %p248 = scmp.ne.s32.totalorder %s231, %s247
      %p249 = scmp.eq.s32.totalorder %s45, 0
      %p250 = por %p248, %p249
      %s251 = ssub.s32 %s46, %s58
      %p252 = scmp.eq.s32.totalorder %s251, 0
      %s254 = sadd.s32 %s253, 1
      %s255 = scalar_select %p252, %s253, %s254
      %p258 = pneg %p252
      %p259 = scmp.eq.s32.totalorder %s39, 5
      %p260 = por %p258, %p259
      %p261 = scmp.ne.s32.totalorder %s253, %s256
      %p262 = scmp.eq.s32.totalorder %s39, 0
      %p263 = por %p261, %p262
      %p264 = scmp.ne.s32.totalorder %s253, %s256
      %p265 = scmp.eq.s32.totalorder %s44, 5
      %p266 = por %p264, %p265
      %p267 = scmp.ne.s32.totalorder %s256, %s257
      %p268 = scmp.eq.s32.totalorder %s44, 0
      %p269 = por %p267, %p268
      %p270 = scmp.ne.s32.totalorder %s256, %s257
      %p271 = scmp.eq.s32.totalorder %s45, 5
      %p272 = por %p270, %p271
      %p274 = scmp.ne.s32.totalorder %s257, %s273
      %p275 = scmp.eq.s32.totalorder %s45, 0
      %p276 = por %p274, %p275
      %s278 = sadd.s32 %s277, 1
      %p281 = scmp.eq.s32.totalorder %s39, 5
      %p282 = scmp.ne.s32.totalorder %s277, %s279
      %p283 = scmp.eq.s32.totalorder %s39, 0
      %p284 = por %p282, %p283
      %p285 = scmp.ne.s32.totalorder %s277, %s279
      %p286 = scmp.eq.s32.totalorder %s44, 5
      %p287 = por %p285, %p286
      %p288 = scmp.ne.s32.totalorder %s279, %s280
      %p289 = scmp.eq.s32.totalorder %s44, 0
      %p290 = por %p288, %p289
      %p291 = scmp.ne.s32.totalorder %s279, %s280
      %p292 = scmp.eq.s32.totalorder %s45, 5
      %p293 = por %p291, %p292
      %p295 = scmp.ne.s32.totalorder %s280, %s294
      %p296 = scmp.eq.s32.totalorder %s45, 0
      %p297 = por %p295, %p296
      %s299 = sadd.s32 %s298, 1
      %p302 = scmp.eq.s32.totalorder %s39, 5
      %p303 = scmp.ne.s32.totalorder %s298, %s300
      %p304 = scmp.eq.s32.totalorder %s39, 0
      %p305 = por %p303, %p304
      %p306 = scmp.ne.s32.totalorder %s298, %s300
      %p307 = scmp.eq.s32.totalorder %s44, 5
      %p308 = por %p306, %p307
      %p309 = scmp.ne.s32.totalorder %s300, %s301
      %p310 = scmp.eq.s32.totalorder %s44, 0
      %p311 = por %p309, %p310
      %p312 = scmp.ne.s32.totalorder %s300, %s301
      %p313 = scmp.eq.s32.totalorder %s45, 5
      %p314 = por %p312, %p313
      %p316 = scmp.ne.s32.totalorder %s301, %s315
      %p317 = scmp.eq.s32.totalorder %s45, 0
      %p318 = por %p316, %p317
      %s320 = sadd.s32 %s319, 1
      %p323 = scmp.eq.s32.totalorder %s39, 5
      %p324 = scmp.ne.s32.totalorder %s319, %s321
      %p325 = scmp.eq.s32.totalorder %s39, 0
      %p326 = por %p324, %p325
      %p327 = scmp.ne.s32.totalorder %s319, %s321
      %p328 = scmp.eq.s32.totalorder %s44, 5
      %p329 = por %p327, %p328
      %p330 = scmp.ne.s32.totalorder %s321, %s322
      %p331 = scmp.eq.s32.totalorder %s44, 0
      %p332 = por %p330, %p331
      %p333 = scmp.ne.s32.totalorder %s321, %s322
      %p334 = scmp.eq.s32.totalorder %s45, 5
      %p335 = por %p333, %p334
      %p337 = scmp.ne.s32.totalorder %s322, %s336
      %p338 = scmp.eq.s32.totalorder %s45, 0
      %p339 = por %p337, %p338
      %s341 = sadd.s32 %s340, 1
      %p344 = scmp.eq.s32.totalorder %s39, 5
      %p345 = scmp.ne.s32.totalorder %s340, %s342
      %p346 = scmp.eq.s32.totalorder %s39, 0
      %p347 = por %p345, %p346
      %p348 = scmp.ne.s32.totalorder %s340, %s342
      %p349 = scmp.eq.s32.totalorder %s44, 5
      %p350 = por %p348, %p349
      %p351 = scmp.ne.s32.totalorder %s342, %s343
      %p352 = scmp.eq.s32.totalorder %s44, 0
      %p353 = por %p351, %p352
      %p354 = scmp.ne.s32.totalorder %s342, %s343
      %p355 = scmp.eq.s32.totalorder %s45, 5
      %p356 = por %p354, %p355
      %p358 = scmp.ne.s32.totalorder %s343, %s357
      %p359 = scmp.eq.s32.totalorder %s45, 0
      %p360 = por %p358, %p359
      %s361 = ssub.s32 %s46, %s58
      %s362 = ssub.s32 %s47, %s54
      %s363 = sor.u32 %s361, %s362
      %p364 = scmp.eq.s32.totalorder %s363, 0
      %s366 = sadd.s32 %s365, 1
      %s367 = scalar_select %p364, %s365, %s366
      %p370 = pneg %p364
      %p371 = scmp.eq.s32.totalorder %s39, 5
      %p372 = por %p370, %p371
      %p373 = scmp.ne.s32.totalorder %s365, %s368
      %p374 = scmp.eq.s32.totalorder %s39, 0
      %p375 = por %p373, %p374
      %p376 = scmp.ne.s32.totalorder %s365, %s368
      %p377 = scmp.eq.s32.totalorder %s44, 5
      %p378 = por %p376, %p377
      %p379 = scmp.ne.s32.totalorder %s368, %s369
      %p380 = scmp.eq.s32.totalorder %s44, 0
      %p381 = por %p379, %p380
      %p382 = scmp.ne.s32.totalorder %s368, %s369
      %p383 = scmp.eq.s32.totalorder %s45, 5
      %p384 = por %p382, %p383
      %p386 = scmp.ne.s32.totalorder %s369, %s385
      %p387 = scmp.eq.s32.totalorder %s45, 0
      %p388 = por %p386, %p387
      %s389 = ssub.s32 %s46, %s58
      %s390 = ssub.s32 %s47, %s54
      %s391 = sor.u32 %s389, %s390
      %p392 = scmp.eq.s32.totalorder %s391, 0
      %s394 = sadd.s32 %s393, 1
      %s395 = scalar_select %p392, %s393, %s394
      %p398 = pneg %p392
      %p399 = scmp.eq.s32.totalorder %s39, 5
      %p400 = por %p398, %p399
      %p401 = scmp.ne.s32.totalorder %s393, %s396
      %p402 = scmp.eq.s32.totalorder %s39, 0
      %p403 = por %p401, %p402
      %p404 = scmp.ne.s32.totalorder %s393, %s396
      %p405 = scmp.eq.s32.totalorder %s44, 5
      %p406 = por %p404, %p405
      %p407 = scmp.ne.s32.totalorder %s396, %s397
      %p408 = scmp.eq.s32.totalorder %s44, 0
      %p409 = por %p407, %p408
      %p410 = scmp.ne.s32.totalorder %s396, %s397
      %p411 = scmp.eq.s32.totalorder %s45, 5
      %p412 = por %p410, %p411
      %p414 = scmp.ne.s32.totalorder %s397, %s413
      %p415 = scmp.eq.s32.totalorder %s45, 0
      %p416 = por %p414, %p415
      %p417 = scmp.le.s32.totalorder 1, %s39
      %p418 = scmp.lt.s32.totalorder %s39, 7
      %p419 = pnand %p417, %p418
      %p420 = pneg %p419
      // Predicated region
      $region9: #{tpu_custom_call.1} parent=5 // pred_check
        _
      $region10: #{tpu_custom_call.1} parent=5 // pred_check_branch
        %422 = sbr.rel (%p419) target = $region12
      $region11: #{tpu_custom_call.1} parent=5 // pred_region
        %s423 = ssub.s32 %s39, 1
        // Predicated region
        $region13: #{tpu_custom_call.1} parent=11 // pred_check
          %p424 = pneg %p290
        $region14: #{tpu_custom_call.1} parent=11 // pred_check_branch
          %426 = sbr.rel (%p424) target = $region16
        $region15: #{tpu_custom_call.1} parent=11 // pred_region
          %s428 = ssub.s32 128, 128
          %429 = vsyncadd [#allocation15], %s428
          %s430 = sshll.u32 [#allocation14], 4
          %s431 = int_to_ptr.vmem [resolvable:$true] %s430
          %436 = dma.hbm_to_vmem [thread:$0]  %s7, 128, %s431, [#allocation15], 64, 64, 4
        $region16: #{tpu_custom_call.1} parent=11 // pred_fallthru
          _
        // Predicated region
        $region17: #{tpu_custom_call.1} parent=11 // pred_check
          %p437 = pneg %p311
        $region18: #{tpu_custom_call.1} parent=11 // pred_check_branch
          %439 = sbr.rel (%p437) target = $region20
        $region19: #{tpu_custom_call.1} parent=11 // pred_region
          %s441 = ssub.s32 256, 256
          %442 = vsyncadd [#allocation15], %s441
          %s443 = sshll.u32 [#allocation16], 4
          %s444 = int_to_ptr.vmem [resolvable:$true] %s443
          %449 = dma.hbm_to_vmem [thread:$0]  %s8, 256, %s444, [#allocation15], 128, 128, 8
        $region20: #{tpu_custom_call.1} parent=11 // pred_fallthru
          _
        // Predicated region
        $region21: #{tpu_custom_call.1} parent=11 // pred_check
          %p450 = pneg %p332
        $region22: #{tpu_custom_call.1} parent=11 // pred_check_branch
          %452 = sbr.rel (%p450) target = $region24
        $region23: #{tpu_custom_call.1} parent=11 // pred_region
          %s454 = ssub.s32 128, 128
          %455 = vsyncadd [#allocation18], %s454
          %s456 = sshll.u32 [#allocation17], 4
          %s457 = int_to_ptr.vmem [resolvable:$true] %s456
          %462 = dma.hbm_to_vmem [thread:$0]  %s9, 128, %s457, [#allocation18], 64, 64, 4
        $region24: #{tpu_custom_call.1} parent=11 // pred_fallthru
          _
        // Predicated region
        $region25: #{tpu_custom_call.1} parent=11 // pred_check
          %p463 = pneg %p353
        $region26: #{tpu_custom_call.1} parent=11 // pred_check_branch
          %465 = sbr.rel (%p463) target = $region28
        $region27: #{tpu_custom_call.1} parent=11 // pred_region
          %s467 = ssub.s32 256, 256
          %468 = vsyncadd [#allocation18], %s467
          %s469 = sshll.u32 [#allocation19], 4
          %s470 = int_to_ptr.vmem [resolvable:$true] %s469
          %475 = dma.hbm_to_vmem [thread:$0]  %s10, 256, %s470, [#allocation18], 128, 128, 8
        $region28: #{tpu_custom_call.1} parent=11 // pred_fallthru
          _
      $region12: #{tpu_custom_call.1} parent=5 // pred_fallthru
        _
      %p476 = scmp.lt.s32.totalorder %s39, 6
      // Predicated region
      $region29: #{tpu_custom_call.1} parent=5 // pred_check
        %p477 = pneg %p476
      $region30: #{tpu_custom_call.1} parent=5 // pred_check_branch
        %479 = sbr.rel (%p477) target = $region32
      $region31: #{tpu_custom_call.1} parent=5 // pred_region
        // Predicated region
        $region33: #{tpu_custom_call.1} parent=31 // pred_check
          %p480 = pneg %p73
        $region34: #{tpu_custom_call.1} parent=31 // pred_check_branch
          %482 = sbr.rel (%p480) target = $region36
        $region35: #{tpu_custom_call.1} parent=31 // pred_region
          %s483 = sand.u32 %s63, 1
          %s484 = scalar_lea.sflag [#allocation3], %s483
          %s485 = sand.u32 %s63, 1
          %s486 = smul.addr %s485, 8
          %s487 = scalar_lea.vmem [#allocation2], %s486
          %s489 = ssub.s32 128, 128
          %490 = vsyncadd %s484, %s489
          %s491 = smul.addr %s46, 3
          %s492 = sadd.s32 %s47, %s491
          %s493 = smul.addr %s492, 128
          %s494 = scalar_lea.hbm %s0, %s493
          %s496 = sshll.u32 %s487, 4
          %s497 = int_to_ptr.vmem [resolvable:$true] %s496
          %499 = dma.hbm_to_vmem [thread:$0]  %s494, 128, %s497, %s484
        $region36: #{tpu_custom_call.1} parent=31 // pred_fallthru
          _
        // Predicated region
        $region37: #{tpu_custom_call.1} parent=31 // pred_check
          %p500 = pneg %p107
        $region38: #{tpu_custom_call.1} parent=31 // pred_check_branch
          %502 = sbr.rel (%p500) target = $region40
        $region39: #{tpu_custom_call.1} parent=31 // pred_region
          %s503 = sand.u32 %s39, 1
          %s504 = scalar_lea.sflag [#allocation6], %s503
          %s505 = sand.u32 %s97, 1
          %s506 = smul.addr %s505, 8
          %s507 = scalar_lea.vmem [#allocation5], %s506
          %s508 = ssub.s32 %s47, 1
          %p509 = scmp.gt.s32.totalorder %s508, 0
          %s510 = scalar_select %p509, %s508, 0
          %s512 = ssub.s32 128, 128
          %513 = vsyncadd %s504, %s512
          %s514 = smul.addr %s46, 3
          %s515 = sadd.s32 %s510, %s514
          %s516 = smul.addr %s515, 128
          %s517 = scalar_lea.hbm %s1, %s516
          %s519 = sshll.u32 %s507, 4
          %s520 = int_to_ptr.vmem [resolvable:$true] %s519
          %522 = dma.hbm_to_vmem [thread:$0]  %s517, 128, %s520, %s504
        $region40: #{tpu_custom_call.1} parent=31 // pred_fallthru
          _
        // Predicated region
        $region41: #{tpu_custom_call.1} parent=31 // pred_check
          %p523 = pneg %p141
        $region42: #{tpu_custom_call.1} parent=31 // pred_check_branch
          %525 = sbr.rel (%p523) target = $region44
        $region43: #{tpu_custom_call.1} parent=31 // pred_region
          %s526 = sand.u32 %s39, 1
          %s527 = scalar_lea.sflag [#allocation6], %s526
          %s528 = sand.u32 %s131, 1
          %s529 = smul.addr %s528, 8
          %s530 = scalar_lea.vmem [#allocation7], %s529
          %s531 = sadd.s32 %s47, 1
          %p532 = scmp.lt.s32.totalorder %s531, 2
          %s533 = scalar_select %p532, %s531, 2
          %s535 = ssub.s32 128, 128
          %536 = vsyncadd %s527, %s535
          %s537 = smul.addr %s46, 3
          %s538 = sadd.s32 %s533, %s537
          %s539 = smul.addr %s538, 128
          %s540 = scalar_lea.hbm %s2, %s539
          %s542 = sshll.u32 %s530, 4
          %s543 = int_to_ptr.vmem [resolvable:$true] %s542
          %545 = dma.hbm_to_vmem [thread:$0]  %s540, 128, %s543, %s527
        $region44: #{tpu_custom_call.1} parent=31 // pred_fallthru
          _
        // Predicated region
        $region45: #{tpu_custom_call.1} parent=31 // pred_check
          %p546 = pneg %p169
        $region46: #{tpu_custom_call.1} parent=31 // pred_check_branch
          %548 = sbr.rel (%p546) target = $region48
        $region47: #{tpu_custom_call.1} parent=31 // pred_region
          %s549 = sand.u32 %s39, 1
          %s550 = scalar_lea.sflag [#allocation9], %s549
          %s551 = sand.u32 %s159, 1
          %s552 = smul.addr %s551, 8
          %s553 = scalar_lea.vmem [#allocation8], %s552
          %s555 = ssub.s32 128, 128
          %556 = vsyncadd %s550, %s555
          %s557 = smul.addr %s46, 3
          %s558 = sadd.s32 %s47, %s557
          %s559 = smul.addr %s558, 128
          %s560 = scalar_lea.hbm %s3, %s559
          %s562 = sshll.u32 %s553, 4
          %s563 = int_to_ptr.vmem [resolvable:$true] %s562
          %565 = dma.hbm_to_vmem [thread:$0]  %s560, 128, %s563, %s550
        $region48: #{tpu_custom_call.1} parent=31 // pred_fallthru
          _
        // Predicated region
        $region49: #{tpu_custom_call.1} parent=31 // pred_check
          %p566 = pneg %p203
        $region50: #{tpu_custom_call.1} parent=31 // pred_check_branch
          %568 = sbr.rel (%p566) target = $region52
        $region51: #{tpu_custom_call.1} parent=31 // pred_region
          %s569 = sand.u32 %s39, 1
          %s570 = scalar_lea.sflag [#allocation9], %s569
          %s571 = sand.u32 %s193, 1
          %s572 = smul.addr %s571, 8
          %s573 = scalar_lea.vmem [#allocation10], %s572
          %s574 = ssub.s32 %s47, 1
          %p575 = scmp.gt.s32.totalorder %s574, 0
          %s576 = scalar_select %p575, %s574, 0
          %s578 = ssub.s32 128, 128
          %579 = vsyncadd %s570, %s578
          %s580 = smul.addr %s46, 3
          %s581 = sadd.s32 %s576, %s580
          %s582 = smul.addr %s581, 128
          %s583 = scalar_lea.hbm %s4, %s582
          %s585 = sshll.u32 %s573, 4
          %s586 = int_to_ptr.vmem [resolvable:$true] %s585
          %588 = dma.hbm_to_vmem [thread:$0]  %s583, 128, %s586, %s570
        $region52: #{tpu_custom_call.1} parent=31 // pred_fallthru
          _
        // Predicated region
        $region53: #{tpu_custom_call.1} parent=31 // pred_check
          %p589 = pneg %p237
        $region54: #{tpu_custom_call.1} parent=31 // pred_check_branch
          %591 = sbr.rel (%p589) target = $region56
        $region55: #{tpu_custom_call.1} parent=31 // pred_region
          %s592 = sand.u32 %s39, 1
          %s593 = scalar_lea.sflag [#allocation12], %s592
          %s594 = sand.u32 %s227, 1
          %s595 = smul.addr %s594, 8
          %s596 = scalar_lea.vmem [#allocation11], %s595
          %s597 = sadd.s32 %s47, 1
          %p598 = scmp.lt.s32.totalorder %s597, 2
          %s599 = scalar_select %p598, %s597, 2
          %s601 = ssub.s32 128, 128
          %602 = vsyncadd %s593, %s601
          %s603 = smul.addr %s46, 3
          %s604 = sadd.s32 %s599, %s603
          %s605 = smul.addr %s604, 128
          %s606 = scalar_lea.hbm %s5, %s605
          %s608 = sshll.u32 %s596, 4
          %s609 = int_to_ptr.vmem [resolvable:$true] %s608
          %611 = dma.hbm_to_vmem [thread:$0]  %s606, 128, %s609, %s593
        $region56: #{tpu_custom_call.1} parent=31 // pred_fallthru
          _
        // Predicated region
        $region57: #{tpu_custom_call.1} parent=31 // pred_check
          %p612 = pneg %p263
        $region58: #{tpu_custom_call.1} parent=31 // pred_check_branch
          %614 = sbr.rel (%p612) target = $region60
        $region59: #{tpu_custom_call.1} parent=31 // pred_region
          %s615 = sand.u32 %s39, 1
          %s616 = scalar_lea.sflag [#allocation12], %s615
          %s617 = sand.u32 %s253, 1
          %s618 = smul.addr %s617, 8
          %s619 = scalar_lea.vmem [#allocation13], %s618
          %s621 = ssub.s32 128, 128
          %622 = vsyncadd %s616, %s621
          %s623 = smul.addr %s46, 128
          %s624 = scalar_lea.hbm %s6, %s623
          %s626 = sshll.u32 %s619, 4
          %s627 = int_to_ptr.vmem [resolvable:$true] %s626
          %629 = dma.hbm_to_vmem [thread:$0]  %s624, 128, %s627, %s616
        $region60: #{tpu_custom_call.1} parent=31 // pred_fallthru
          _
      $region32: #{tpu_custom_call.1} parent=5 // pred_fallthru
        _
      %p630 = scmp.le.s32.totalorder 1, %s39
      %p631 = scmp.lt.s32.totalorder %s39, 7
      %p632 = pnand %p630, %p631
      %p633 = pneg %p632
      // Predicated region
      $region61: #{tpu_custom_call.1} parent=5 // pred_check
        _
      $region62: #{tpu_custom_call.1} parent=5 // pred_check_branch
        %635 = sbr.rel (%p632) target = $region64
      $region63: #{tpu_custom_call.1} parent=5 // pred_region
        %s636 = ssub.s32 %s39, 1
        %s637 = sand.u32 %s66, 1
        %s638 = scalar_lea.sflag [#allocation3], %s637
        %s639 = sand.u32 %s66, 1
        %s640 = smul.addr %s639, 8
        %s641 = scalar_lea.vmem [#allocation2], %s640
        // Predicated region
        $region65: #{tpu_custom_call.1} parent=63 // pred_check
          %p642 = pneg %p79
        $region66: #{tpu_custom_call.1} parent=63 // pred_check_branch
          %644 = sbr.rel (%p642) target = $region68
        $region67: #{tpu_custom_call.1} parent=63 // pred_region
          %645 = dma.done %s638, 128
        $region68: #{tpu_custom_call.1} parent=63 // pred_fallthru
          _
        %s646 = sand.u32 %s44, 1
        %s647 = scalar_lea.sflag [#allocation6], %s646
        %s648 = sand.u32 %s100, 1
        %s649 = smul.addr %s648, 8
        %s650 = scalar_lea.vmem [#allocation5], %s649
        // Predicated region
        $region69: #{tpu_custom_call.1} parent=63 // pred_check
          %p651 = pneg %p113
        $region70: #{tpu_custom_call.1} parent=63 // pred_check_branch
          %653 = sbr.rel (%p651) target = $region72
        $region71: #{tpu_custom_call.1} parent=63 // pred_region
          %654 = dma.done %s647, 128
        $region72: #{tpu_custom_call.1} parent=63 // pred_fallthru
          _
        %s655 = sand.u32 %s44, 1
        %s656 = scalar_lea.sflag [#allocation6], %s655
        %s657 = sand.u32 %s134, 1
        %s658 = smul.addr %s657, 8
        %s659 = scalar_lea.vmem [#allocation7], %s658
        // Predicated region
        $region73: #{tpu_custom_call.1} parent=63 // pred_check
          %p660 = pneg %p147
        $region74: #{tpu_custom_call.1} parent=63 // pred_check_branch
          %662 = sbr.rel (%p660) target = $region76
        $region75: #{tpu_custom_call.1} parent=63 // pred_region
          %663 = dma.done %s656, 128
        $region76: #{tpu_custom_call.1} parent=63 // pred_fallthru
          _
        %s664 = sand.u32 %s44, 1
        %s665 = scalar_lea.sflag [#allocation9], %s664
        %s666 = sand.u32 %s162, 1
        %s667 = smul.addr %s666, 8
        %s668 = scalar_lea.vmem [#allocation8], %s667
        // Predicated region
        $region77: #{tpu_custom_call.1} parent=63 // pred_check
          %p669 = pneg %p175
        $region78: #{tpu_custom_call.1} parent=63 // pred_check_branch
          %671 = sbr.rel (%p669) target = $region80
        $region79: #{tpu_custom_call.1} parent=63 // pred_region
          %672 = dma.done %s665, 128
        $region80: #{tpu_custom_call.1} parent=63 // pred_fallthru
          _
        %s673 = sand.u32 %s44, 1
        %s674 = scalar_lea.sflag [#allocation9], %s673
        %s675 = sand.u32 %s196, 1
        %s676 = smul.addr %s675, 8
        %s677 = scalar_lea.vmem [#allocation10], %s676
        // Predicated region
        $region81: #{tpu_custom_call.1} parent=63 // pred_check
          %p678 = pneg %p209
        $region82: #{tpu_custom_call.1} parent=63 // pred_check_branch
          %680 = sbr.rel (%p678) target = $region84
        $region83: #{tpu_custom_call.1} parent=63 // pred_region
          %681 = dma.done %s674, 128
        $region84: #{tpu_custom_call.1} parent=63 // pred_fallthru
          _
        %s682 = sand.u32 %s44, 1
        %s683 = scalar_lea.sflag [#allocation12], %s682
        %s684 = sand.u32 %s230, 1
        %s685 = smul.addr %s684, 8
        %s686 = scalar_lea.vmem [#allocation11], %s685
        // Predicated region
        $region85: #{tpu_custom_call.1} parent=63 // pred_check
          %p687 = pneg %p243
        $region86: #{tpu_custom_call.1} parent=63 // pred_check_branch
          %689 = sbr.rel (%p687) target = $region88
        $region87: #{tpu_custom_call.1} parent=63 // pred_region
          %690 = dma.done %s683, 128
        $region88: #{tpu_custom_call.1} parent=63 // pred_fallthru
          _
        %s691 = sand.u32 %s44, 1
        %s692 = scalar_lea.sflag [#allocation12], %s691
        %s693 = sand.u32 %s256, 1
        %s694 = smul.addr %s693, 8
        %s695 = scalar_lea.vmem [#allocation13], %s694
        // Predicated region
        $region89: #{tpu_custom_call.1} parent=63 // pred_check
          %p696 = pneg %p269
        $region90: #{tpu_custom_call.1} parent=63 // pred_check_branch
          %698 = sbr.rel (%p696) target = $region92
        $region91: #{tpu_custom_call.1} parent=63 // pred_region
          %699 = dma.done %s692, 128
        $region92: #{tpu_custom_call.1} parent=63 // pred_fallthru
          _
        // Predicated region
        $region93: #{tpu_custom_call.1} parent=63 // pred_check
          %p700 = pneg %p290
        $region94: #{tpu_custom_call.1} parent=63 // pred_check_branch
          %702 = sbr.rel (%p700) target = $region96
        $region95: #{tpu_custom_call.1} parent=63 // pred_region
          %703 = dma.done [#allocation15], 128
        $region96: #{tpu_custom_call.1} parent=63 // pred_fallthru
          _
        // Predicated region
        $region97: #{tpu_custom_call.1} parent=63 // pred_check
          %p704 = pneg %p311
        $region98: #{tpu_custom_call.1} parent=63 // pred_check_branch
          %706 = sbr.rel (%p704) target = $region100
        $region99: #{tpu_custom_call.1} parent=63 // pred_region
          %707 = dma.done [#allocation15], 256
        $region100: #{tpu_custom_call.1} parent=63 // pred_fallthru
          _
        // Predicated region
        $region101: #{tpu_custom_call.1} parent=63 // pred_check
          %p708 = pneg %p332
        $region102: #{tpu_custom_call.1} parent=63 // pred_check_branch
          %710 = sbr.rel (%p708) target = $region104
        $region103: #{tpu_custom_call.1} parent=63 // pred_region
          %711 = dma.done [#allocation18], 128
        $region104: #{tpu_custom_call.1} parent=63 // pred_fallthru
          _
        // Predicated region
        $region105: #{tpu_custom_call.1} parent=63 // pred_check
          %p712 = pneg %p353
        $region106: #{tpu_custom_call.1} parent=63 // pred_check_branch
          %714 = sbr.rel (%p712) target = $region108
        $region107: #{tpu_custom_call.1} parent=63 // pred_region
          %715 = dma.done [#allocation18], 256
        $region108: #{tpu_custom_call.1} parent=63 // pred_fallthru
          _
        %s716 = sand.u32 %s66, 1
        %s717 = scalar_lea.sflag [#allocation3], %s716
        %s718 = sand.u32 %s66, 1
        %s719 = smul.addr %s718, 8
        %s720 = scalar_lea.vmem [#allocation2], %s719
        %p721 = pneg %p79
        %p722 = pneg %p76
        %s723 = sand.u32 %s44, 1
        %s724 = scalar_lea.sflag [#allocation6], %s723
        %s725 = sand.u32 %s100, 1
        %s726 = smul.addr %s725, 8
        %s727 = scalar_lea.vmem [#allocation5], %s726
        %p728 = pneg %p113
        %p729 = pneg %p110
        %s730 = sand.u32 %s44, 1
        %s731 = scalar_lea.sflag [#allocation6], %s730
        %s732 = sand.u32 %s134, 1
        %s733 = smul.addr %s732, 8
        %s734 = scalar_lea.vmem [#allocation7], %s733
        %p735 = pneg %p147
        %p736 = pneg %p144
        %s737 = sand.u32 %s44, 1
        %s738 = scalar_lea.sflag [#allocation9], %s737
        %s739 = sand.u32 %s162, 1
        %s740 = smul.addr %s739, 8
        %s741 = scalar_lea.vmem [#allocation8], %s740
        %p742 = pneg %p175
        %p743 = pneg %p172
        %s744 = sand.u32 %s44, 1
        %s745 = scalar_lea.sflag [#allocation9], %s744
        %s746 = sand.u32 %s196, 1
        %s747 = smul.addr %s746, 8
        %s748 = scalar_lea.vmem [#allocation10], %s747
        %p749 = pneg %p209
        %p750 = pneg %p206
        %s751 = sand.u32 %s44, 1
        %s752 = scalar_lea.sflag [#allocation12], %s751
        %s753 = sand.u32 %s230, 1
        %s754 = smul.addr %s753, 8
        %s755 = scalar_lea.vmem [#allocation11], %s754
        %p756 = pneg %p243
        %p757 = pneg %p240
        %s758 = sand.u32 %s44, 1
        %s759 = scalar_lea.sflag [#allocation12], %s758
        %s760 = sand.u32 %s256, 1
        %s761 = smul.addr %s760, 8
        %s762 = scalar_lea.vmem [#allocation13], %s761
        %p763 = pneg %p269
        %p764 = pneg %p266
        %p765 = pneg %p290
        %p766 = pneg %p287
        %p767 = pneg %p311
        %p768 = pneg %p308
        %p769 = pneg %p332
        %p770 = pneg %p329
        %p771 = pneg %p353
        %p772 = pneg %p350
        %p773 = pneg %p381
        %p774 = pneg %p378
        %s775 = sand.u32 %s368, 1
        %s776 = scalar_lea.sflag [#allocation4], %s775
        %s777 = sand.u32 %s368, 1
        %s778 = smul.addr %s777, 8
        %s779 = scalar_lea.vmem [#allocation20], %s778
        %p780 = pneg %p409
        %p781 = pneg %p406
        %s782 = sand.u32 %s396, 1
        %s783 = scalar_lea.sflag [#allocation22], %s782
        %s784 = sand.u32 %s396, 1
        %s785 = smul.addr %s784, 8
        %s786 = scalar_lea.vmem [#allocation21], %s785
        %s787 = ssub.s32 %s49, 1
        %p788 = scmp.gt.s32.totalorder %s787, 0
        %s789 = scalar_select %p788, %s787, 0
        %s790 = sadd.s32 %s49, 1
        %p791 = scmp.lt.s32.totalorder %s790, 2
        %s792 = scalar_select %p791, %s790, 2
        %s793 = ssub.s32 %s49, 1
        %p794 = scmp.gt.s32.totalorder %s793, 0
        %s795 = scalar_select %p794, %s793, 0
        %s796 = sadd.s32 %s49, 1
        %p797 = scmp.lt.s32.totalorder %s796, 2
        %s798 = scalar_select %p797, %s796, 2
        %v800 = vld [vmem:[%s641] sm:$0xff]
        %v801 = vld [vmem:[%s695] sm:$0xff]
        %803 = vset.pattern.permute.xlu0 0
        %804 = vperm.xlu0 %803, %v801
        %v805 = vpop.permute.xlu0 %804
        %v807 = vadd.f32 %v800, %v805
        %v808 = vpack.c.bf16 %v807, %v807
        %v809 = vld [vmem:[%s650] sm:$0xff]
        %v810 = vadd.f32 %v809, %v805
        %v811 = vpack.c.bf16 %v810, %v810
        %v812 = vld [vmem:[%s659] sm:$0xff]
        %v813 = vadd.f32 %v812, %v805
        %v814 = vpack.c.bf16 %v813, %v813
        %v815 = vld [vmem:[%s668] sm:$0xff]
        %v816 = vpack.c.bf16 %v815, %v815
        %v817 = vld [vmem:[%s677] sm:$0xff]
        %v818 = vpack.c.bf16 %v817, %v817
        %v819 = vld [vmem:[%s686] sm:$0xff]
        %v820 = vpack.c.bf16 %v819, %v819
        %s821 = smul.u32 %s49, 128
        %v822 = vlaneseq
        %v823 = vand.u32 %v822, 127
        %v824 = vstv %s821
        %v825 = vadd.s32 %v824, %v823
        %vm826 = vcmp.ge.s32.totalorder %v825, 4
        %v827 = vadd.s32 %v825, 4
        %vm828 = vcmp.lt.s32.totalorder %v827, 384
        %830 = vrot.lane.b32.xlu0 %v811, 4
        %v831 = vpop.permute.xlu0 %830
        %833 = vrot.lane.b32.xlu0 %v808, 4
        %v834 = vpop.permute.xlu0 %833
        %vm835 = vcmask 31744
        %v838 = vsel %vm835, %v831, %v834
        %v840 = vsel %vm826, 1, 0
        %vm841 = vcmp.eq.s32.totalorder %v840, 1
        %vm842 = vmpackc.low %vm841, %vm841
        %v843 = vsel %vm842, %v838, 0
        %844 = vrot.lane.b32.xlu0 %v808, 124
        %v845 = vpop.permute.xlu0 %844
        %847 = vrot.lane.b32.xlu0 %v814, 124
        %v848 = vpop.permute.xlu0 %847
        %vm849 = vcmask 1014784
        %v852 = vsel %vm849, %v845, %v848
        %v854 = vsel %vm828, 1, 0
        %vm855 = vcmp.eq.s32.totalorder %v854, 1
        %vm856 = vmpackc.low %vm855, %vm855
        %v857 = vsel %vm856, %v852, 0
        %859 = vrot.lane.b32.xlu0 %v818, 4
        %v860 = vpop.permute.xlu0 %859
        %862 = vrot.lane.b32.xlu0 %v816, 4
        %v863 = vpop.permute.xlu0 %862
        %v866 = vsel %vm835, %v860, %v863
        %v868 = vsel %vm842, %v866, 0
        %869 = vrot.lane.b32.xlu0 %v816, 124
        %v870 = vpop.permute.xlu0 %869
        %872 = vrot.lane.b32.xlu0 %v820, 124
        %v873 = vpop.permute.xlu0 %872
        %v876 = vsel %vm849, %v870, %v873
        %v878 = vsel %vm856, %v876, 0
        %v879 = vrot.slane %v808, 4
        %v881 = vrot.slane %v868, 4
        %v883 = vrot.slane %v878, 4
        %vm884 = vcmask 1043456
        %v887 = vsel %vm884, %v843, %v879
        %v891 = vsel %vm884, %v857, %v881
        %v895 = vsel %vm884, %v816, %v883
        %v897 = vld [vmem:[#allocation14] sm:$0xf]
        %v898 = vld [vmem:[#allocation14 + $0x4] sm:$0xf]
        %v899 = vld [vmem:[#allocation16] sm:$0xff]
        %v900 = vld [vmem:[#allocation16 + $0x8] sm:$0xff]
        %902 = vset.pattern.permute.xlu0 0
        %903 = vperm.xlu0 %902, %v899
        %v904 = vpop.permute.xlu0 %903
        %907 = vset.pattern.permute.xlu0 0
        %908 = vperm.xlu0 %907, %v900
        %v909 = vpop.permute.xlu0 %908
        %v913 = vunpack.c.l.b16 %v897
        %v914 = vunpack.c.l.b16 %v898
        %v915 = vpack.c.b16 %v914, %v913
        %vm916 = vcmask 392192
        %v918 = vsel %vm916, %v915, 0
        %920 = vmatprep.subr.bf16.mxu0 0
        %921 = vmatpush1.bf16.msra.mxu0 %v887
        %922 = vmatprep.subr.bf16.mxu0 0
        %923 = vmatpush1.bf16.msra.mxu0 %v891
        %924 = vmatprep.subr.bf16.mxu0 0
        %925 = vmatpush1.bf16.msra.mxu0 %v895
        %926 = vmatprep.subr.bf16.mxu0 0
        %927 = vmatpush1.bf16.msra.mxu0 0
        %928 = vmatprep.subr.bf16.mxu0 0
        %929 = vmatpush1.bf16.msra.mxu0 0
        %930 = vmatprep.subr.bf16.mxu0 0
        %931 = vmatpush1.bf16.msra.mxu0 0
        %932 = vmatprep.subr.bf16.mxu0 0
        %933 = vmatpush1.bf16.msra.mxu0 0
        %934 = vmatprep.subr.bf16.mxu0 0
        %935 = vmatpush1.bf16.msra.mxu0 0
        %936 = vmatprep.subr.bf16.mxu0 0
        %937 = vmatpush1.bf16.msra.mxu0 0
        %938 = vmatprep.subr.bf16.mxu0 0
        %939 = vmatpush1.bf16.msra.mxu0 0
        %940 = vmatprep.subr.bf16.mxu0 0
        %941 = vmatpush1.bf16.msra.mxu0 0
        %942 = vmatprep.subr.bf16.mxu0 0
        %943 = vmatpush1.bf16.msra.mxu0 0
        %944 = vmatprep.subr.bf16.mxu0 0
        %945 = vmatpush1.bf16.msra.mxu0 0
        %946 = vmatprep.subr.bf16.mxu0 0
        %947 = vmatpush1.bf16.msra.mxu0 0
        %948 = vmatprep.subr.bf16.mxu0 0
        %949 = vmatpush1.bf16.msra.mxu0 0
        %950 = vmatprep.subr.bf16.mxu0 0
        %951 = vmatpush1.bf16.msra.mxu0 0
        %952 = vmatprep.mubr.bf16.mxu0 0
        %953 = vmatmul.mubr.bf16.gmra.mrb[0].mxu0 %v918
        %v954 = vpop.f32.mrb[0].mxu0
        %v955 = vadd.f32 %v904, %v954
        %v956 = vpop.f32.mrb[0].mxu0
        %v957 = vpop.f32.mrb[0].mxu0
        %v958 = vadd.f32 %v909, %v957
        %v959 = vpop.f32.mrb[0].mxu0
        %960 = vdwg.mxu0
        %v961 = vxor.u32 %v955, 2147483648
        %v962 = vmul.f32 %v961, 1.442695
        %v963 = vpow.pop %v962
        %v964 = vadd.f32 %v963, 1.0
        %v965 = vrcp.pop %v964
        %v966 = vmul.f32 1.0, %v965
        %v967 = vtanh.pop %v958
        %v968 = vmul.f32 %v966, %v967
        %v969 = vld [vmem:[#allocation17] sm:$0xf]
        %v970 = vld [vmem:[#allocation17 + $0x4] sm:$0xf]
        %v971 = vpack.c.bf16 %v968, %v968
        %v972 = vld [vmem:[#allocation19] sm:$0xff]
        %v973 = vld [vmem:[#allocation19 + $0x8] sm:$0xff]
        %975 = vset.pattern.permute.xlu0 0
        %976 = vperm.xlu0 %975, %v972
        %v977 = vpop.permute.xlu0 %976
        %980 = vset.pattern.permute.xlu0 0
        %981 = vperm.xlu0 %980, %v973
        %v982 = vpop.permute.xlu0 %981
        %v986 = vunpack.c.l.b16 %v969
        %v987 = vunpack.c.l.b16 %v970
        %v988 = vpack.c.b16 %v987, %v986
        %vm989 = vcmask 64512
        %v991 = vsel %vm989, %v988, 0
        %v994 = vsel %vm884, %v971, 0
        %996 = vmatprep.subr.bf16.mxu0 0
        %997 = vmatpush1.bf16.msra.mxu0 %v994
        %998 = vmatprep.subr.bf16.mxu0 0
        %999 = vmatpush1.bf16.msra.mxu0 0
        %1000 = vmatprep.subr.bf16.mxu0 0
        %1001 = vmatpush1.bf16.msra.mxu0 0
        %1002 = vmatprep.subr.bf16.mxu0 0
        %1003 = vmatpush1.bf16.msra.mxu0 0
        %1004 = vmatprep.subr.bf16.mxu0 0
        %1005 = vmatpush1.bf16.msra.mxu0 0
        %1006 = vmatprep.subr.bf16.mxu0 0
        %1007 = vmatpush1.bf16.msra.mxu0 0
        %1008 = vmatprep.subr.bf16.mxu0 0
        %1009 = vmatpush1.bf16.msra.mxu0 0
        %1010 = vmatprep.subr.bf16.mxu0 0
        %1011 = vmatpush1.bf16.msra.mxu0 0
        %1012 = vmatprep.subr.bf16.mxu0 0
        %1013 = vmatpush1.bf16.msra.mxu0 0
        %1014 = vmatprep.subr.bf16.mxu0 0
        %1015 = vmatpush1.bf16.msra.mxu0 0
        %1016 = vmatprep.subr.bf16.mxu0 0
        %1017 = vmatpush1.bf16.msra.mxu0 0
        %1018 = vmatprep.subr.bf16.mxu0 0
        %1019 = vmatpush1.bf16.msra.mxu0 0
        %1020 = vmatprep.subr.bf16.mxu0 0
        %1021 = vmatpush1.bf16.msra.mxu0 0
        %1022 = vmatprep.subr.bf16.mxu0 0
        %1023 = vmatpush1.bf16.msra.mxu0 0
        %1024 = vmatprep.subr.bf16.mxu0 0
        %1025 = vmatpush1.bf16.msra.mxu0 0
        %1026 = vmatprep.subr.bf16.mxu0 0
        %1027 = vmatpush1.bf16.msra.mxu0 0
        %1028 = vmatprep.mubr.bf16.mxu0 0
        %1029 = vmatmul.mubr.bf16.gmra.mrb[0].mxu0 %v991
        %v1030 = vpop.f32.mrb[0].mxu0
        %v1031 = vadd.f32 %v977, %v1030
        %v1032 = vpop.f32.mrb[0].mxu0
        %v1033 = vpop.f32.mrb[0].mxu0
        %v1034 = vadd.f32 %v982, %v1033
        %v1035 = vpop.f32.mrb[0].mxu0
        %1036 = vdwg.mxu0
        %v1037 = vadd.f32 %v800, %v1031
        %v1038 = vmul.f32 %v1037, 0.70710677
        %1039 = vst [vmem:[%s779] sm:$0xff] %v1038
        %1040 = vst [vmem:[%s786] sm:$0xff] %v1034
        %s1041 = sand.u32 %s368, 1
        %s1042 = scalar_lea.sflag [#allocation4], %s1041
        %s1043 = sand.u32 %s368, 1
        %s1044 = smul.addr %s1043, 8
        %s1045 = scalar_lea.vmem [#allocation20], %s1044
        %s1046 = sand.u32 %s396, 1
        %s1047 = scalar_lea.sflag [#allocation22], %s1046
        %s1048 = sand.u32 %s396, 1
        %s1049 = smul.addr %s1048, 8
        %s1050 = scalar_lea.vmem [#allocation21], %s1049
        // Predicated region
        $region109: #{tpu_custom_call.1} parent=63 // pred_check
          %p1051 = pneg %p378
        $region110: #{tpu_custom_call.1} parent=63 // pred_check_branch
          %1053 = sbr.rel (%p1051) target = $region112
        $region111: #{tpu_custom_call.1} parent=63 // pred_region
          %s1055 = ssub.s32 128, 128
          %1056 = vsyncadd %s1042, %s1055
          %s1057 = smul.addr %s48, 3
          %s1058 = sadd.s32 %s49, %s1057
          %s1059 = smul.addr %s1058, 128
          %s1060 = scalar_lea.hbm %s11, %s1059
          %s1062 = sshll.u32 %s1045, 4
          %s1063 = int_to_ptr.vmem [resolvable:$true] %s1062
          %1065 = dma.vmem_to_hbm [thread:$0]  %s1063, 128, %s1060, %s1042
        $region112: #{tpu_custom_call.1} parent=63 // pred_fallthru
          _
        // Predicated region
        $region113: #{tpu_custom_call.1} parent=63 // pred_check
          %p1066 = pneg %p406
        $region114: #{tpu_custom_call.1} parent=63 // pred_check_branch
          %1068 = sbr.rel (%p1066) target = $region116
        $region115: #{tpu_custom_call.1} parent=63 // pred_region
          %s1070 = ssub.s32 128, 128
          %1071 = vsyncadd %s1047, %s1070
          %s1072 = smul.addr %s48, 3
          %s1073 = sadd.s32 %s49, %s1072
          %s1074 = smul.addr %s1073, 128
          %s1075 = scalar_lea.hbm %s12, %s1074
          %s1077 = sshll.u32 %s1050, 4
          %s1078 = int_to_ptr.vmem [resolvable:$true] %s1077
          %1080 = dma.vmem_to_hbm [thread:$0]  %s1078, 128, %s1075, %s1047
        $region116: #{tpu_custom_call.1} parent=63 // pred_fallthru
          _
      $region64: #{tpu_custom_call.1} parent=5 // pred_fallthru
        _
      %p1081 = scmp.le.s32.totalorder 2, %s39
      // Predicated region
      $region117: #{tpu_custom_call.1} parent=5 // pred_check
        %p1082 = pneg %p1081
      $region118: #{tpu_custom_call.1} parent=5 // pred_check_branch
        %1084 = sbr.rel (%p1082) target = $region120
      $region119: #{tpu_custom_call.1} parent=5 // pred_region
        %s1085 = ssub.s32 %s39, 2
        // Predicated region
        $region121: #{tpu_custom_call.1} parent=119 // pred_check
          %p1086 = pneg %p384
        $region122: #{tpu_custom_call.1} parent=119 // pred_check_branch
          %1088 = sbr.rel (%p1086) target = $region124
        $region123: #{tpu_custom_call.1} parent=119 // pred_region
          %s1089 = sand.u32 %s369, 1
          %s1090 = scalar_lea.sflag [#allocation4], %s1089
          %s1091 = sand.u32 %s369, 1
          %s1092 = smul.addr %s1091, 8
          %s1093 = scalar_lea.vmem [#allocation20], %s1092
          %1094 = dma.done %s1090, 128
        $region124: #{tpu_custom_call.1} parent=119 // pred_fallthru
          _
        // Predicated region
        $region125: #{tpu_custom_call.1} parent=119 // pred_check
          %p1095 = pneg %p412
        $region126: #{tpu_custom_call.1} parent=119 // pred_check_branch
          %1097 = sbr.rel (%p1095) target = $region128
        $region127: #{tpu_custom_call.1} parent=119 // pred_region
          %s1098 = sand.u32 %s397, 1
          %s1099 = scalar_lea.sflag [#allocation22], %s1098
          %s1100 = sand.u32 %s397, 1
          %s1101 = smul.addr %s1100, 8
          %s1102 = scalar_lea.vmem [#allocation21], %s1101
          %1103 = dma.done %s1099, 128
        $region128: #{tpu_custom_call.1} parent=119 // pred_fallthru
          _
      $region120: #{tpu_custom_call.1} parent=5 // pred_fallthru
        _
    $region6: #{tpu_custom_call.1} parent=1 // loop_footer
      %s43 = sadd.s32 1, %s39
    $region7: #{tpu_custom_call.1} parent=1 // loop_footer_branch
      %38 = sbr.rel target = $region3
    $region8: #{tpu_custom_call.1} parent=1 // loop_exit
      _
    %1104 = vsyncpa [#allocation3], 1
    %s1105 = scalar_lea.sflag [#allocation3], 1
    %1106 = vsyncpa %s1105, 1
    %1107 = vsyncpa [#allocation6], 1
    %s1108 = scalar_lea.sflag [#allocation6], 1
    %1109 = vsyncpa %s1108, 1
    %1110 = vsyncpa [#allocation9], 1
    %s1111 = scalar_lea.sflag [#allocation9], 1
    %1112 = vsyncpa %s1111, 1
    %1113 = vsyncpa [#allocation12], 1
    %s1114 = scalar_lea.sflag [#allocation12], 1
    %1115 = vsyncpa %s1114, 1
    %1116 = vsyncpa [#allocation15], 1
    %1117 = vsyncpa [#allocation18], 1
    %1118 = vsyncpa [#allocation4], 1
    %s1119 = scalar_lea.sflag [#allocation4], 1
    %1120 = vsyncpa %s1119, 1
    %1121 = vsyncpa [#allocation22], 1
    %s1122 = scalar_lea.sflag [#allocation22], 1
    %1123 = vsyncpa %s1122, 1

</llo_original>
